<compile_context>
chip_gen: v7x
topology: tpu7x:2x2x1
jax: 0.10.0
libtpu: 0.0.40
codegen_flags: <defaults>
</compile_context>

<pallas_src>
import functools

import jax
import jax.numpy as jnp
from jax.experimental import pallas as pl
from jax.experimental.pallas import tpu as pltpu

FP_DIM = 1489          # hard-coded in the module (nn.Linear(1489, 1024))
FP_PAD = 1536          # 1489 padded up to a multiple of 128
FC_HID = 1024
PRE_HID = 512
EPS_L2 = 1e-12
EPS_LN = 1e-5


def _round_up(x, m):
    return ((x + m - 1) // m) * m


@functools.lru_cache(maxsize=1)
def _num_tensorcores_per_chip():
    """Best-effort TensorCore count per chip (2 on megacore/v7x-style, else 1)."""
    try:
        kind = jax.devices()[0].device_kind.lower()
    except Exception:
        return 1
    return 2 if any(tag in kind for tag in ("v3", "v4", "v5p", "7")) else 1


def _pick_batch_tile(batch):
    """Batch tile: multiple of 16; >=2 grid steps on 2-TC chips; big on 1-TC chips."""
    n_tc = _num_tensorcores_per_chip()
    bp = _round_up(max(batch, 1), 16)
    cap = 512 if n_tc > 1 else 1024
    if n_tc > 1 and bp > 16:
        tb = _round_up(pl.cdiv(bp, n_tc), 16)   # at least n_tc grid steps
    else:
        tb = bp
    return min(cap, tb)


# ----------------------------------------------------------------------------
# Pallas kernel: fc + F.normalize + CrossModalAttention + LayerNorm + pre head
# (everything after the encoder), one batch tile per grid step.
# ----------------------------------------------------------------------------
def _model_head_kernel(
    x1_ref, fp_ref,
    wfc_ref, bfc_ref,
    wattn_ref, battn_ref,
    wa_ref, wb_ref, bout_ref,
    out_ref,
):
    f32 = jnp.float32
    bf16 = jnp.bfloat16

    x1 = x1_ref[...].astype(f32)

    # --- self.fc (fused Linear->Dropout(eval)->Linear): x_fp = fp @ W_fc + b_fc
    x_fp = jnp.dot(fp_ref[...], wfc_ref[...], preferred_element_type=f32) + bfc_ref[...]

    # --- F.normalize(_, dim=1): x * rsqrt(max(||x||^2, eps^2)) == x / max(||x||, eps)
    def l2_normalize(v):
        inv = jax.lax.rsqrt(
            jnp.maximum(jnp.sum(v * v, axis=-1, keepdims=True), EPS_L2 * EPS_L2))
        return v * inv

    xf = l2_normalize(x1)       # F.normalize(x1)
    x_fp = l2_normalize(x_fp)   # F.normalize(self.fc(fp))

    # --- CrossModalAttention(query=xf, key_value=x_fp); single kv token =>
    # per-head softmax weight is exactly 1.0, so the context equals the fused
    # kv_proj -> V -> out_proj projection of x_fp (independent of Q/K).
    attn = (jnp.dot(x_fp.astype(bf16), wattn_ref[...], preferred_element_type=f32)
            + battn_ref[...])

    # --- residual + LayerNorm (affine folded into wa_ref host-side).
    z = xf + 0.5 * attn
    mu = jnp.mean(z, axis=-1, keepdims=True)
    var = jnp.mean((z - mu) * (z - mu), axis=-1, keepdims=True)
    z_hat = (z - mu) * jax.lax.rsqrt(var + EPS_LN)

    # --- fused self.pre head (purely linear in eval mode):
    #   out = concat([zn, x_fp]) @ W1 @ W2 + b  ==  z_hat . wa + x_fp . wb + b
    out = (jnp.sum(z_hat * wa_ref[...], axis=-1, keepdims=True)
           + jnp.sum(x_fp * wb_ref[...], axis=-1, keepdims=True)
           + bout_ref[...])
    out_ref[...] = out.astype(out_ref.dtype)


# ----------------------------------------------------------------------------
# Host-side fusion of all linear chains (exact in eval mode; run ONCE, cache).
# ----------------------------------------------------------------------------
def fuse_head_params(params):
    f32 = jnp.float32
    bf16 = jnp.bfloat16
    E = params["fc_w2"].shape[1]

    # fc: Linear(1489,1024) -> Dropout(eval) -> Linear(1024,E), no nonlinearity.
    w_fc = params["fc_w1"].astype(f32) @ params["fc_w2"].astype(f32)             # (1489, E)
    b_fc = params["fc_b1"].astype(f32) @ params["fc_w2"].astype(f32) + params["fc_b2"]
    w_fc = jnp.pad(w_fc, ((0, FP_PAD - FP_DIM), (0, 0)))                         # (1536, E)

    # attention chain (single kv token): kv_proj -> V -> out_proj.
    vw = params["v_w"].astype(f32)
    ow = params["o_w"].astype(f32)
    w_attn = params["kv_w"].astype(f32) @ vw @ ow                                 # (E, E)
    b_attn = (params["kv_b"].astype(f32) @ vw + params["v_b"]) @ ow + params["o_b"]

    # pre head: Linear(2E,512) -> Dropout(eval) -> Linear(512,1) is purely
    # linear, so it collapses to two E-length vectors and a scalar bias.
    pw2 = params["pre_w2"].astype(f32)                                            # (512, 1)
    wa = params["pre_w1"][:E].astype(f32) @ pw2                                    # (E, 1)  zn path
    wb = params["pre_w1"][E:].astype(f32) @ pw2                                    # (E, 1)  x_fp path
    b_out = params["pre_b1"].astype(f32) @ pw2 + params["pre_b2"]                  # (1, 1)

    # Fold the LayerNorm affine into the zn-path vector:
    #   zn @ wa = z_hat @ (gamma ⊙ wa) + beta @ wa
    ln_g = params["ln_g"].astype(f32)                                              # (1, E)
    ln_b = params["ln_b"].astype(f32)                                              # (1, E)
    wa_row = ln_g * wa.T                                                           # (1, E)
    b_out = b_out + ln_b @ wa                                                      # (1, 1)
    wb_row = wb.T                                                                  # (1, E)

    return {
        "w_fc": w_fc.astype(bf16), "b_fc": b_fc.astype(f32),
        "w_attn": w_attn.astype(bf16), "b_attn": b_attn.astype(f32),
        "wa": wa_row.astype(f32), "wb": wb_row.astype(f32),
        "b_out": b_out.astype(f32),
    }


# ----------------------------------------------------------------------------
# Head wrapper: jitted so the fp bf16 cast + pad fuse with the kernel staging.
# ----------------------------------------------------------------------------
@jax.jit
def _pallas_head(fused, x1, fp):
    B, E = x1.shape

    TB = _pick_batch_tile(B)
    nb = pl.cdiv(B, TB)
    B_pad = nb * TB

    fp = fp.astype(jnp.bfloat16)                            # 0/1 values -> exact in bf16
    if fp.shape[1] != FP_PAD:
        fp = jnp.pad(fp, ((0, 0), (0, FP_PAD - fp.shape[1])))
    if B_pad != B:
        x1 = jnp.pad(x1, ((0, B_pad - B), (0, 0)))
        fp = jnp.pad(fp, ((0, B_pad - B), (0, 0)))

    args = (
        x1, fp,
        fused["w_fc"], fused["b_fc"],
        fused["w_attn"], fused["b_attn"],
        fused["wa"], fused["wb"], fused["b_out"],
    )

    def const_spec(shape):
        return pl.BlockSpec(shape, lambda i: (0,) * len(shape))

    in_specs = [
        pl.BlockSpec((TB, E), lambda i: (i, 0)),            # x1 tile
        pl.BlockSpec((TB, FP_PAD), lambda i: (i, 0)),        # fp tile
        const_spec((FP_PAD, E)),                             # w_fc
        const_spec((1, E)),                                  # b_fc
        const_spec((E, E)),                                  # w_attn
        const_spec((1, E)),                                  # b_attn
        const_spec((1, E)),                                  # wa (LN-folded pre vector)
        const_spec((1, E)),                                  # wb
        const_spec((1, 1)),                                  # b_out
    ]

    # Real VMEM footprint (tiles + weights, double-buffered) + margin; stays
    # well under every generation's VMEM (including v7x's 64 MiB).
    tile_bytes = TB * E * 4 + TB * FP_PAD * 2 + TB * 4
    weight_bytes = sum(int(a.size) * a.dtype.itemsize for a in args[2:])
    vmem_limit = int(max(8 << 20,
                         min(56 << 20, 2 * (tile_bytes + weight_bytes) + (4 << 20))))

    out = pl.pallas_call(
        _model_head_kernel,
        out_shape=jax.ShapeDtypeStruct((B_pad, 1), jnp.float32),
        grid_spec=pltpu.PrefetchScalarGridSpec(
            num_scalar_prefetch=0,
            grid=(nb,),
            in_specs=in_specs,
            out_specs=pl.BlockSpec((TB, 1), lambda i: (i, 0)),
        ),
        compiler_params=pltpu.CompilerParams(
            dimension_semantics=("parallel",),       # shards batch tiles across TCs
            vmem_limit_bytes=vmem_limit,
        ),
    )(*args)
    return out[:B]


# ----------------------------------------------------------------------------
# Encoder stub (the real GNN encoder is passed in externally in PyTorch)
# ----------------------------------------------------------------------------
def _encoder_stub(params, x, edge_index, edge_attr, batch, num_graphs):
    h = jnp.tanh(x @ params["enc_w"] + params["enc_b"])                # (N, E)
    one_hot = (batch[:, None] == jnp.arange(num_graphs)[None, :]).astype(jnp.float32)
    counts = jnp.maximum(one_hot.sum(axis=0), 1.0)                     # (B,)
    x1 = (one_hot.T @ h) / counts[:, None]                             # (B, E)
    edge_w = jax.nn.sigmoid(edge_attr @ params["enc_we"]).reshape(-1)  # (num_edges,)
    node_w = jax.nn.sigmoid(x @ params["enc_wn"]).reshape(-1)          # (N,)
    g_weight = (x1, jnp.concatenate([edge_w, node_w]))
    return x1, g_weight


# ----------------------------------------------------------------------------
# Full forward (mirrors Model_gat_fp.forward). Pass a cached `fused` dict
# (from fuse_head_params) to avoid re-fusing the weights every call.
# ----------------------------------------------------------------------------
def model_gat_fp_forward(params, data, fused=None):
    x, edge_index, batch, y, edge_attr, fp_flat, w = (
        data["x"], data["edge_index"], data["batch"], data["y"],
        data["edge_attr"], data["fps"], data["w"],
    )
    num_graphs = fp_flat.shape[0] // FP_DIM
    fp = fp_flat.reshape(num_graphs, FP_DIM)

    x1, g_weight = _encoder_stub(params, x, edge_index, edge_attr, batch, num_graphs)

    if fused is None:                      # slow path; callers should cache this
        fused = fuse_head_params(params)
    out2d = _pallas_head(fused, x1, fp)    # (B, 1)
    out = out2d.reshape(-1)

    len_w = edge_index.shape[1]
    weight = g_weight[1]
    edge_weight = weight[:len_w]
    x_weight = weight[len_w:]

    mask = y != 999                        # eager boolean masking (outside jit)
    out_loss = out[mask]
    y_loss = y[mask]
    w_loss = w[mask]
    return out, y, w, edge_weight, x_weight, out_loss, y_loss, w_loss


# ----------------------------------------------------------------------------
# Deterministic parameter construction
# ----------------------------------------------------------------------------
def make_params(key, node_dim, edge_dim, embed_dim):
    ks = jax.random.split(key, 16)

    def lin(k, fan_in, fan_out):
        s = 1.0 / jnp.sqrt(jnp.float32(fan_in))
        return jax.random.uniform(k, (fan_in, fan_out), jnp.float32, -s, s)

    return {
        # encoder stub
        "enc_w": lin(ks[0], node_dim, embed_dim),
        "enc_b": jnp.zeros((embed_dim,), jnp.float32),
        "enc_we": lin(ks[1], edge_dim, 1),
        "enc_wn": lin(ks[2], node_dim, 1),
        # self.fc
        "fc_w1": lin(ks[3], FP_DIM, FC_HID),
        "fc_b1": jnp.zeros((1, FC_HID), jnp.float32),
        "fc_w2": lin(ks[4], FC_HID, embed_dim),
        "fc_b2": jnp.zeros((1, embed_dim), jnp.float32),
        # cross_attn.kv_proj + MultiheadAttention V/out projections (x @ W layout).
        # Q/K projections of nn.MultiheadAttention provably cannot affect the
        # single-kv-token output and are intentionally not materialized.
        "kv_w": lin(ks[5], embed_dim, embed_dim),
        "kv_b": jnp.zeros((1, embed_dim), jnp.float32),
        "v_w": lin(ks[8], embed_dim, embed_dim),
        "v_b": jnp.zeros((1, embed_dim), jnp.float32),
        "o_w": lin(ks[9], embed_dim, embed_dim),
        "o_b": jnp.zeros((1, embed_dim), jnp.float32),
        # cross_attn.norm
        "ln_g": jnp.ones((1, embed_dim), jnp.float32),
        "ln_b": jnp.zeros((1, embed_dim), jnp.float32),
        # self.pre
        "pre_w1": lin(ks[10], 2 * embed_dim, PRE_HID),
        "pre_b1": jnp.zeros((1, PRE_HID), jnp.float32),
        "pre_w2": lin(ks[11], PRE_HID, 1),
        "pre_b2": jnp.zeros((1, 1), jnp.float32),
    }


if __name__ == "__main__":
    key = jax.random.PRNGKey(0)
    k_data = jax.random.split(key, 8)

    num_graphs = 4      # batch of graphs
    num_nodes = 16
    num_edges = 24
    node_dim = 32
    edge_dim = 8
    embed_dim = 256     # output_dim of the module (kept small; default is 512)

    data = {
        "x": jax.random.normal(k_data[0], (num_nodes, node_dim), jnp.float32),
        "edge_index": jax.random.randint(k_data[1], (2, num_edges), 0, num_nodes),
        "batch": jnp.repeat(jnp.arange(num_graphs), num_nodes // num_graphs),
        "y": jnp.array([0.5, 999.0, 1.25, 999.0], jnp.float32),
        "edge_attr": jax.random.normal(k_data[2], (num_edges, edge_dim), jnp.float32),
        "fps": (jax.random.uniform(k_data[3], (num_graphs * FP_DIM,)) > 0.5).astype(jnp.float32),
        "w": jax.random.uniform(k_data[4], (num_graphs,), jnp.float32),
    }

    params = make_params(k_data[5], node_dim, edge_dim, embed_dim)

    # Fuse the weight chains ONCE (hoisted out of forward) and reuse.
    fused = fuse_head_params(params)

    outputs = model_gat_fp_forward(params, data, fused=fused)
    outputs = jax.block_until_ready(outputs)
    (out, y, w, edge_weight, x_weight, out_loss, y_loss, w_loss) = outputs

    assert out.shape == (num_graphs,)
    assert edge_weight.shape == (num_edges,)
    assert x_weight.shape == (num_nodes,)
    assert out_loss.shape == y_loss.shape == w_loss.shape == (2,)
    assert bool(jnp.all(jnp.isfinite(out)))

    print("KERNEL_OK")
</pallas_src>

<mosaic_0001>
module attributes {stable_mosaic.version = 11 : i64} {
  func.func @_model_head_kernel(%arg0: i32, %arg1: memref<16x256xf32, #tpu.memory_space<vmem>>, %arg2: memref<16x1536xbf16, #tpu.memory_space<vmem>>, %arg3: memref<1536x256xbf16, #tpu.memory_space<vmem>>, %arg4: memref<1x256xf32, #tpu.memory_space<vmem>>, %arg5: memref<256x256xbf16, #tpu.memory_space<vmem>>, %arg6: memref<1x256xf32, #tpu.memory_space<vmem>>, %arg7: memref<1x256xf32, #tpu.memory_space<vmem>>, %arg8: memref<1x256xf32, #tpu.memory_space<vmem>>, %arg9: memref<1x1xf32, #tpu.memory_space<vmem>>, %arg10: memref<16x1xf32, #tpu.memory_space<vmem>>) attributes {dimension_semantics = [#tpu.dimension_semantics<parallel>], iteration_bounds = array<i64: 1>, scalar_prefetch = 0 : i64, scratch_operands = 0 : i64, tpu.core_type = #tpu.core_type<tc>, window_params = [{transform_indices = @transform_0, window_bounds = array<i64: 16, 256>}, {transform_indices = @transform_1, window_bounds = array<i64: 16, 1536>}, {pipeline_mode = #tpu.pipeline_mode<synchronous>, transform_indices = @transform_2, window_bounds = array<i64: 1536, 256>}, {pipeline_mode = #tpu.pipeline_mode<synchronous>, transform_indices = @transform_3, window_bounds = array<i64: 1, 256>}, {pipeline_mode = #tpu.pipeline_mode<synchronous>, transform_indices = @transform_4, window_bounds = array<i64: 256, 256>}, {pipeline_mode = #tpu.pipeline_mode<synchronous>, transform_indices = @transform_5, window_bounds = array<i64: 1, 256>}, {pipeline_mode = #tpu.pipeline_mode<synchronous>, transform_indices = @transform_6, window_bounds = array<i64: 1, 256>}, {pipeline_mode = #tpu.pipeline_mode<synchronous>, transform_indices = @transform_7, window_bounds = array<i64: 1, 256>}, {pipeline_mode = #tpu.pipeline_mode<synchronous>, transform_indices = @transform_8, window_bounds = array<i64: 1, 1>}, {transform_indices = @transform_9, window_bounds = array<i64: 16, 1>}]} {
    %c0 = arith.constant 0 : index
    %c0_0 = arith.constant 0 : index
    %0 = vector.load %arg1[%c0, %c0_0] : memref<16x256xf32, #tpu.memory_space<vmem>>, vector<16x256xf32>
    %c0_1 = arith.constant 0 : index
    %c0_2 = arith.constant 0 : index
    %1 = vector.load %arg2[%c0_1, %c0_2] : memref<16x1536xbf16, #tpu.memory_space<vmem>>, vector<16x1536xbf16>
    %c0_3 = arith.constant 0 : index
    %c0_4 = arith.constant 0 : index
    %2 = vector.load %arg3[%c0_3, %c0_4] : memref<1536x256xbf16, #tpu.memory_space<vmem>>, vector<1536x256xbf16>
    %cst = arith.constant dense<0.000000e+00> : vector<16x256xf32>
    %3 = tpu.matmul %1, %2, %cst {dimension_numbers = #tpu.dot_dimension_numbers<[1], [0], [0], [1], [0, 0, 1, 1], [], []>} : vector<16x1536xbf16>, vector<1536x256xbf16>, vector<16x256xf32> -> vector<16x256xf32>
    %c0_5 = arith.constant 0 : index
    %c0_6 = arith.constant 0 : index
    %4 = vector.load %arg4[%c0_5, %c0_6] : memref<1x256xf32, #tpu.memory_space<vmem>>, vector<1x256xf32>
    %5 = vector.broadcast %4 : vector<1x256xf32> to vector<16x256xf32>
    %6 = arith.addf %3, %5 : vector<16x256xf32>
    %7 = arith.mulf %0, %0 : vector<16x256xf32>
    %cst_7 = arith.constant dense<0.000000e+00> : vector<16xf32>
    %8 = vector.multi_reduction <add>, %7, %cst_7 [1] : vector<16x256xf32> to vector<16xf32>
    %9 = vector.shape_cast %8 : vector<16xf32> to vector<16x1xf32>
    %cst_8 = arith.constant 1.000000e-24 : f32
    %10 = vector.broadcast %cst_8 : f32 to vector<16x1xf32>
    %11 = arith.maximumf %9, %10 : vector<16x1xf32>
    %12 = math.rsqrt %11 : vector<16x1xf32>
    %13 = vector.broadcast %12 : vector<16x1xf32> to vector<16x256xf32>
    %14 = arith.mulf %0, %13 : vector<16x256xf32>
    %15 = arith.mulf %6, %6 : vector<16x256xf32>
    %cst_9 = arith.constant dense<0.000000e+00> : vector<16xf32>
    %16 = vector.multi_reduction <add>, %15, %cst_9 [1] : vector<16x256xf32> to vector<16xf32>
    %17 = vector.shape_cast %16 : vector<16xf32> to vector<16x1xf32>
    %cst_10 = arith.constant 1.000000e-24 : f32
    %18 = vector.broadcast %cst_10 : f32 to vector<16x1xf32>
    %19 = arith.maximumf %17, %18 : vector<16x1xf32>
    %20 = math.rsqrt %19 : vector<16x1xf32>
    %21 = vector.broadcast %20 : vector<16x1xf32> to vector<16x256xf32>
    %22 = arith.mulf %6, %21 : vector<16x256xf32>
    %23 = arith.truncf %22 : vector<16x256xf32> to vector<16x256xbf16>
    %c0_11 = arith.constant 0 : index
    %c0_12 = arith.constant 0 : index
    %24 = vector.load %arg5[%c0_11, %c0_12] : memref<256x256xbf16, #tpu.memory_space<vmem>>, vector<256x256xbf16>
    %cst_13 = arith.constant dense<0.000000e+00> : vector<16x256xf32>
    %25 = tpu.matmul %23, %24, %cst_13 {dimension_numbers = #tpu.dot_dimension_numbers<[1], [0], [0], [1], [0, 0, 1, 1], [], []>} : vector<16x256xbf16>, vector<256x256xbf16>, vector<16x256xf32> -> vector<16x256xf32>
    %c0_14 = arith.constant 0 : index
    %c0_15 = arith.constant 0 : index
    %26 = vector.load %arg6[%c0_14, %c0_15] : memref<1x256xf32, #tpu.memory_space<vmem>>, vector<1x256xf32>
    %27 = vector.broadcast %26 : vector<1x256xf32> to vector<16x256xf32>
    %28 = arith.addf %25, %27 : vector<16x256xf32>
    %cst_16 = arith.constant 5.000000e-01 : f32
    %29 = vector.broadcast %cst_16 : f32 to vector<16x256xf32>
    %30 = arith.mulf %29, %28 : vector<16x256xf32>
    %31 = arith.addf %14, %30 : vector<16x256xf32>
    %cst_17 = arith.constant dense<0.000000e+00> : vector<16xf32>
    %32 = vector.multi_reduction <add>, %31, %cst_17 [1] : vector<16x256xf32> to vector<16xf32>
    %33 = vector.shape_cast %32 : vector<16xf32> to vector<16x1xf32>
    %cst_18 = arith.constant 2.560000e+02 : f32
    %34 = vector.broadcast %cst_18 : f32 to vector<16x1xf32>
    %35 = arith.divf %33, %34 : vector<16x1xf32>
    %36 = vector.broadcast %35 : vector<16x1xf32> to vector<16x256xf32>
    %37 = arith.subf %31, %36 : vector<16x256xf32>
    %38 = vector.broadcast %35 : vector<16x1xf32> to vector<16x256xf32>
    %39 = arith.subf %31, %38 : vector<16x256xf32>
    %40 = arith.mulf %37, %39 : vector<16x256xf32>
    %cst_19 = arith.constant dense<0.000000e+00> : vector<16xf32>
    %41 = vector.multi_reduction <add>, %40, %cst_19 [1] : vector<16x256xf32> to vector<16xf32>
    %42 = vector.shape_cast %41 : vector<16xf32> to vector<16x1xf32>
    %cst_20 = arith.constant 2.560000e+02 : f32
    %43 = vector.broadcast %cst_20 : f32 to vector<16x1xf32>
    %44 = arith.divf %42, %43 : vector<16x1xf32>
    %45 = vector.broadcast %35 : vector<16x1xf32> to vector<16x256xf32>
    %46 = arith.subf %31, %45 : vector<16x256xf32>
    %cst_21 = arith.constant 9.99999974E-6 : f32
    %47 = vector.broadcast %cst_21 : f32 to vector<16x1xf32>
    %48 = arith.addf %44, %47 : vector<16x1xf32>
    %49 = math.rsqrt %48 : vector<16x1xf32>
    %50 = vector.broadcast %49 : vector<16x1xf32> to vector<16x256xf32>
    %51 = arith.mulf %46, %50 : vector<16x256xf32>
    %c0_22 = arith.constant 0 : index
    %c0_23 = arith.constant 0 : index
    %52 = vector.load %arg7[%c0_22, %c0_23] : memref<1x256xf32, #tpu.memory_space<vmem>>, vector<1x256xf32>
    %53 = vector.broadcast %52 : vector<1x256xf32> to vector<16x256xf32>
    %54 = arith.mulf %51, %53 : vector<16x256xf32>
    %cst_24 = arith.constant dense<0.000000e+00> : vector<16xf32>
    %55 = vector.multi_reduction <add>, %54, %cst_24 [1] : vector<16x256xf32> to vector<16xf32>
    %56 = vector.shape_cast %55 : vector<16xf32> to vector<16x1xf32>
    %c0_25 = arith.constant 0 : index
    %c0_26 = arith.constant 0 : index
    %57 = vector.load %arg8[%c0_25, %c0_26] : memref<1x256xf32, #tpu.memory_space<vmem>>, vector<1x256xf32>
    %58 = vector.broadcast %57 : vector<1x256xf32> to vector<16x256xf32>
    %59 = arith.mulf %22, %58 : vector<16x256xf32>
    %cst_27 = arith.constant dense<0.000000e+00> : vector<16xf32>
    %60 = vector.multi_reduction <add>, %59, %cst_27 [1] : vector<16x256xf32> to vector<16xf32>
    %61 = vector.shape_cast %60 : vector<16xf32> to vector<16x1xf32>
    %62 = arith.addf %56, %61 : vector<16x1xf32>
    %c0_28 = arith.constant 0 : index
    %c0_29 = arith.constant 0 : index
    %63 = vector.load %arg9[%c0_28, %c0_29] : memref<1x1xf32, #tpu.memory_space<vmem>>, vector<1x1xf32>
    %64 = vector.broadcast %63 : vector<1x1xf32> to vector<16x1xf32>
    %65 = arith.addf %62, %64 : vector<16x1xf32>
    %c0_30 = arith.constant 0 : index
    %c0_31 = arith.constant 0 : index
    %66 = vector.load %arg10[%c0_30, %c0_31] : memref<16x1xf32, #tpu.memory_space<vmem>>, vector<16x1xf32>
    tpu.vector_store %arg10[%c0_30, %c0_31], %65 {strides = array<i32>} : memref<16x1xf32, #tpu.memory_space<vmem>>, vector<16x1xf32>,
    return
  }
  func.func @transform_0(%arg0: i32) -> (i32, i32) {
    %c0_i32 = arith.constant 0 : i32
    %c0_i32_0 = arith.constant 0 : i32
    return %arg0, %c0_i32 : i32, i32
  }
  func.func @transform_1(%arg0: i32) -> (i32, i32) {
    %c0_i32 = arith.constant 0 : i32
    %c0_i32_0 = arith.constant 0 : i32
    return %arg0, %c0_i32 : i32, i32
  }
  func.func @transform_2(%arg0: i32) -> (i32, i32) {
    %c0_i32 = arith.constant 0 : i32
    %c0_i32_0 = arith.constant 0 : i32
    %c0_i32_1 = arith.constant 0 : i32
    return %c0_i32, %c0_i32_0 : i32, i32
  }
  func.func @transform_3(%arg0: i32) -> (i32, i32) {
    %c0_i32 = arith.constant 0 : i32
    %c0_i32_0 = arith.constant 0 : i32
    %c0_i32_1 = arith.constant 0 : i32
    return %c0_i32, %c0_i32_0 : i32, i32
  }
  func.func @transform_4(%arg0: i32) -> (i32, i32) {
    %c0_i32 = arith.constant 0 : i32
    %c0_i32_0 = arith.constant 0 : i32
    %c0_i32_1 = arith.constant 0 : i32
    return %c0_i32, %c0_i32_0 : i32, i32
  }
  func.func @transform_5(%arg0: i32) -> (i32, i32) {
    %c0_i32 = arith.constant 0 : i32
    %c0_i32_0 = arith.constant 0 : i32
    %c0_i32_1 = arith.constant 0 : i32
    return %c0_i32, %c0_i32_0 : i32, i32
  }
  func.func @transform_6(%arg0: i32) -> (i32, i32) {
    %c0_i32 = arith.constant 0 : i32
    %c0_i32_0 = arith.constant 0 : i32
    %c0_i32_1 = arith.constant 0 : i32
    return %c0_i32, %c0_i32_0 : i32, i32
  }
  func.func @transform_7(%arg0: i32) -> (i32, i32) {
    %c0_i32 = arith.constant 0 : i32
    %c0_i32_0 = arith.constant 0 : i32
    %c0_i32_1 = arith.constant 0 : i32
    return %c0_i32, %c0_i32_0 : i32, i32
  }
  func.func @transform_8(%arg0: i32) -> (i32, i32) {
    %c0_i32 = arith.constant 0 : i32
    %c0_i32_0 = arith.constant 0 : i32
    %c0_i32_1 = arith.constant 0 : i32
    return %c0_i32, %c0_i32_0 : i32, i32
  }
  func.func @transform_9(%arg0: i32) -> (i32, i32) {
    %c0_i32 = arith.constant 0 : i32
    %c0_i32_0 = arith.constant 0 : i32
    return %arg0, %c0_i32 : i32, i32
  }
}

</mosaic_0001>

<llo_original>
// kernel: _pallas_head.1
$region0: #{_pallas_head.1}
  #allocation0 [shape = 'u32[]', space=smem, size = 0x4, offset = 0x4, fixed_abs, tag = 'smem constant byte address 0x4 - core index']
  #allocation1 [shape = 'u32[144,128]{1,0:T(1,128)}', space=vmem, size = 0x12000, scoped, tag = 'internal scratch']
  #allocation2 [shape = 'f32[1,1]{1,0:T(1,128)S(1)}', space=vmem, size = 0x200, scoped, tag = 'scoped memory for _pallas_head.1']
  %s0 = inlined_call_operand.vmem [shape: f32[16,256], index: 0, kind: input, shape index: {}]
  %s1 = inlined_call_operand.vmem [shape: bf16[16,1536], index: 1, kind: input, shape index: {}]
  %s2 = inlined_call_operand.hbm [shape: bf16[1536,256], index: 2, kind: input, shape index: {}]
  %s3 = inlined_call_operand.vmem [shape: f32[1,256], index: 3, kind: input, shape index: {}]
  %s4 = inlined_call_operand.hbm [shape: bf16[256,256], index: 4, kind: input, shape index: {}]
  %s5 = inlined_call_operand.vmem [shape: f32[1,256], index: 5, kind: input, shape index: {}]
  %s6 = inlined_call_operand.vmem [shape: f32[1,256], index: 6, kind: input, shape index: {}]
  %s7 = inlined_call_operand.vmem [shape: f32[1,256], index: 7, kind: input, shape index: {}]
  %s8 = inlined_call_operand.<no memory space> [shape: f32[1,1], index: 8, kind: input, shape index: {}]
  %s9 = inlined_call_operand.vmem [shape: f32[16,1], index: 9, kind: output, shape index: {}]
  %s10 = sld [smem:[#allocation0]]
  $region54: #{_pallas_head.1} parent=0
    _
  %s12 = ssub.s32 1, %s10
  %s13 = scalar_select 0, %s12, %s10
  %v14 = vstv %s8
  %15 = vst [vmem:[#allocation2] sm:$0x1] %v14
  $region1: #{_pallas_head.1} parent=0
    #allocation3 [shape = 'u8[786432]{0}', space=vmem, size = 0xc0000, scoped, tag = 'input window, operand 2, single buffered']
    #allocation4 [shape = 's32[1]{0}', space=sflag, size = 0x4, scoped, tag = 'scoped memory for _pallas_head.1']
    #allocation5 [shape = 'u8[131072]{0}', space=vmem, size = 0x20000, scoped, tag = 'input window, operand 4, single buffered']
    #allocation6 [shape = 's32[1]{0}', space=sflag, size = 0x4, scoped, tag = 'scoped memory for _pallas_head.1']
    %16 = vsyncpa [#allocation4], 0
    %17 = vsyncpa [#allocation6], 0
    // Predicated region
    $region2: #{_pallas_head.1} parent=1 // pred_check
      _
    $region3: #{_pallas_head.1} parent=1 // pred_check_branch
      %19 = sbr.rel (0) target = $region5
    $region4: #{_pallas_head.1} parent=1 // pred_region
      _
    $region5: #{_pallas_head.1} parent=1 // pred_fallthru
      _
    // Predicated region
    $region6: #{_pallas_head.1} parent=1 // pred_check
      _
    $region7: #{_pallas_head.1} parent=1 // pred_check_branch
      %21 = sbr.rel (0) target = $region9
    $region8: #{_pallas_head.1} parent=1 // pred_region
      _
    $region9: #{_pallas_head.1} parent=1 // pred_fallthru
      _
    // Predicated region
    $region10: #{_pallas_head.1} parent=1 // pred_check
      _
    $region11: #{_pallas_head.1} parent=1 // pred_check_branch
      %23 = sbr.rel (0) target = $region13
    $region12: #{_pallas_head.1} parent=1 // pred_region
      %s25 = ssub.s32 24576, 24576
      %26 = vsyncadd [#allocation4], %s25
      %s27 = sshll.u32 [#allocation3], 4
      %s28 = int_to_ptr.vmem [resolvable:$true] %s27
      %33 = dma.hbm_to_vmem [thread:$0]  %s2, 24576, %s28, [#allocation4], 128, 128, 8
    $region13: #{_pallas_head.1} parent=1 // pred_fallthru
      _
    // Predicated region
    $region14: #{_pallas_head.1} parent=1 // pred_check
      _
    $region15: #{_pallas_head.1} parent=1 // pred_check_branch
      %35 = sbr.rel (0) target = $region17
    $region16: #{_pallas_head.1} parent=1 // pred_region
      _
    $region17: #{_pallas_head.1} parent=1 // pred_fallthru
      _
    // Predicated region
    $region18: #{_pallas_head.1} parent=1 // pred_check
      _
    $region19: #{_pallas_head.1} parent=1 // pred_check_branch
      %37 = sbr.rel (0) target = $region21
    $region20: #{_pallas_head.1} parent=1 // pred_region
      %s39 = ssub.s32 4096, 4096
      %40 = vsyncadd [#allocation6], %s39
      %s41 = sshll.u32 [#allocation5], 4
      %s42 = int_to_ptr.vmem [resolvable:$true] %s41
      %47 = dma.hbm_to_vmem [thread:$0]  %s4, 4096, %s42, [#allocation6], 128, 128, 8
    $region21: #{_pallas_head.1} parent=1 // pred_fallthru
      _
    // Predicated region
    $region22: #{_pallas_head.1} parent=1 // pred_check
      _
    $region23: #{_pallas_head.1} parent=1 // pred_check_branch
      %49 = sbr.rel (0) target = $region25
    $region24: #{_pallas_head.1} parent=1 // pred_region
      _
    $region25: #{_pallas_head.1} parent=1 // pred_fallthru
      _
    // Predicated region
    $region26: #{_pallas_head.1} parent=1 // pred_check
      _
    $region27: #{_pallas_head.1} parent=1 // pred_check_branch
      %51 = sbr.rel (0) target = $region29
    $region28: #{_pallas_head.1} parent=1 // pred_region
      _
    $region29: #{_pallas_head.1} parent=1 // pred_fallthru
      _
    // Predicated region
    $region30: #{_pallas_head.1} parent=1 // pred_check
      _
    $region31: #{_pallas_head.1} parent=1 // pred_check_branch
      %53 = sbr.rel (0) target = $region33
    $region32: #{_pallas_head.1} parent=1 // pred_region
      _
    $region33: #{_pallas_head.1} parent=1 // pred_fallthru
      _
    // Predicated region
    $region34: #{_pallas_head.1} parent=1 // pred_check
      _
    $region35: #{_pallas_head.1} parent=1 // pred_check_branch
      %55 = sbr.rel (0) target = $region37
    $region36: #{_pallas_head.1} parent=1 // pred_region
      _
    $region37: #{_pallas_head.1} parent=1 // pred_fallthru
      _
    // Predicated region
    $region38: #{_pallas_head.1} parent=1 // pred_check
      _
    $region39: #{_pallas_head.1} parent=1 // pred_check_branch
      %57 = sbr.rel (0) target = $region41
    $region40: #{_pallas_head.1} parent=1 // pred_region
      %58 = dma.done [#allocation4], 24576
    $region41: #{_pallas_head.1} parent=1 // pred_fallthru
      _
    // Predicated region
    $region42: #{_pallas_head.1} parent=1 // pred_check
      _
    $region43: #{_pallas_head.1} parent=1 // pred_check_branch
      %60 = sbr.rel (0) target = $region45
    $region44: #{_pallas_head.1} parent=1 // pred_region
      %61 = dma.done [#allocation6], 4096
    $region45: #{_pallas_head.1} parent=1 // pred_fallthru
      _
    %v62 = vld [vmem:[%s0] sm:$0xff]
    %v63 = vld [vmem:[%s0 + $0x8] sm:$0xff]
    %v64 = vld [vmem:[%s0 + $0x10] sm:$0xff]
    %v65 = vld [vmem:[%s0 + $0x18] sm:$0xff]
    %v66 = vld [vmem:[%s1] sm:$0xff]
    %v67 = vld [vmem:[%s1 + $0x8] sm:$0xff]
    %v68 = vld [vmem:[%s1 + $0x10] sm:$0xff]
    %v69 = vld [vmem:[%s1 + $0x18] sm:$0xff]
    %v70 = vld [vmem:[%s1 + $0x20] sm:$0xff]
    %v71 = vld [vmem:[%s1 + $0x28] sm:$0xff]
    %v72 = vld [vmem:[%s1 + $0x30] sm:$0xff]
    %v73 = vld [vmem:[%s1 + $0x38] sm:$0xff]
    %v74 = vld [vmem:[%s1 + $0x40] sm:$0xff]
    %v75 = vld [vmem:[%s1 + $0x48] sm:$0xff]
    %v76 = vld [vmem:[%s1 + $0x50] sm:$0xff]
    %v77 = vld [vmem:[%s1 + $0x58] sm:$0xff]
    %v78 = vld [vmem:[#allocation3] sm:$0xff]
    %v79 = vld [vmem:[#allocation3 + $0x8] sm:$0xff]
    %v80 = vld [vmem:[#allocation3 + $0x10] sm:$0xff]
    %v81 = vld [vmem:[#allocation3 + $0x18] sm:$0xff]
    %v82 = vld [vmem:[#allocation3 + $0x20] sm:$0xff]
    %v83 = vld [vmem:[#allocation3 + $0x28] sm:$0xff]
    %v84 = vld [vmem:[#allocation3 + $0x30] sm:$0xff]
    %v85 = vld [vmem:[#allocation3 + $0x38] sm:$0xff]
    %v86 = vld [vmem:[#allocation3 + $0x40] sm:$0xff]
    %v87 = vld [vmem:[#allocation3 + $0x48] sm:$0xff]
    %v88 = vld [vmem:[#allocation3 + $0x50] sm:$0xff]
    %v89 = vld [vmem:[#allocation3 + $0x58] sm:$0xff]
    %v90 = vld [vmem:[#allocation3 + $0x60] sm:$0xff]
    %v91 = vld [vmem:[#allocation3 + $0x68] sm:$0xff]
    %v92 = vld [vmem:[#allocation3 + $0x70] sm:$0xff]
    %v93 = vld [vmem:[#allocation3 + $0x78] sm:$0xff]
    %v94 = vld [vmem:[#allocation3 + $0x80] sm:$0xff]
    %v95 = vld [vmem:[#allocation3 + $0x88] sm:$0xff]
    %v96 = vld [vmem:[#allocation3 + $0x90] sm:$0xff]
    %v97 = vld [vmem:[#allocation3 + $0x98] sm:$0xff]
    %v98 = vld [vmem:[#allocation3 + $0xa0] sm:$0xff]
    %v99 = vld [vmem:[#allocation3 + $0xa8] sm:$0xff]
    %v100 = vld [vmem:[#allocation3 + $0xb0] sm:$0xff]
    %v101 = vld [vmem:[#allocation3 + $0xb8] sm:$0xff]
    %v102 = vld [vmem:[#allocation3 + $0xc0] sm:$0xff]
    %v103 = vld [vmem:[#allocation3 + $0xc8] sm:$0xff]
    %v104 = vld [vmem:[#allocation3 + $0xd0] sm:$0xff]
    %v105 = vld [vmem:[#allocation3 + $0xd8] sm:$0xff]
    %v106 = vld [vmem:[#allocation3 + $0xe0] sm:$0xff]
    %v107 = vld [vmem:[#allocation3 + $0xe8] sm:$0xff]
    %v108 = vld [vmem:[#allocation3 + $0xf0] sm:$0xff]
    %v109 = vld [vmem:[#allocation3 + $0xf8] sm:$0xff]
    %v110 = vld [vmem:[#allocation3 + $0x100] sm:$0xff]
    %v111 = vld [vmem:[#allocation3 + $0x108] sm:$0xff]
    %v112 = vld [vmem:[#allocation3 + $0x110] sm:$0xff]
    %v113 = vld [vmem:[#allocation3 + $0x118] sm:$0xff]
    %v114 = vld [vmem:[#allocation3 + $0x120] sm:$0xff]
    %v115 = vld [vmem:[#allocation3 + $0x128] sm:$0xff]
    %v116 = vld [vmem:[#allocation3 + $0x130] sm:$0xff]
    %v117 = vld [vmem:[#allocation3 + $0x138] sm:$0xff]
    %v118 = vld [vmem:[#allocation3 + $0x140] sm:$0xff]
    %v119 = vld [vmem:[#allocation3 + $0x148] sm:$0xff]
    %v120 = vld [vmem:[#allocation3 + $0x150] sm:$0xff]
    %v121 = vld [vmem:[#allocation3 + $0x158] sm:$0xff]
    %v122 = vld [vmem:[#allocation3 + $0x160] sm:$0xff]
    %v123 = vld [vmem:[#allocation3 + $0x168] sm:$0xff]
    %v124 = vld [vmem:[#allocation3 + $0x170] sm:$0xff]
    %v125 = vld [vmem:[#allocation3 + $0x178] sm:$0xff]
    %v126 = vld [vmem:[#allocation3 + $0x180] sm:$0xff]
    %v127 = vld [vmem:[#allocation3 + $0x188] sm:$0xff]
    %v128 = vld [vmem:[#allocation3 + $0x190] sm:$0xff]
    %v129 = vld [vmem:[#allocation3 + $0x198] sm:$0xff]
    %v130 = vld [vmem:[#allocation3 + $0x1a0] sm:$0xff]
    %v131 = vld [vmem:[#allocation3 + $0x1a8] sm:$0xff]
    %v132 = vld [vmem:[#allocation3 + $0x1b0] sm:$0xff]
    %v133 = vld [vmem:[#allocation3 + $0x1b8] sm:$0xff]
    %v134 = vld [vmem:[#allocation3 + $0x1c0] sm:$0xff]
    %v135 = vld [vmem:[#allocation3 + $0x1c8] sm:$0xff]
    %v136 = vld [vmem:[#allocation3 + $0x1d0] sm:$0xff]
    %v137 = vld [vmem:[#allocation3 + $0x1d8] sm:$0xff]
    %v138 = vld [vmem:[#allocation3 + $0x1e0] sm:$0xff]
    %v139 = vld [vmem:[#allocation3 + $0x1e8] sm:$0xff]
    %v140 = vld [vmem:[#allocation3 + $0x1f0] sm:$0xff]
    %v141 = vld [vmem:[#allocation3 + $0x1f8] sm:$0xff]
    %v142 = vld [vmem:[#allocation3 + $0x200] sm:$0xff]
    %v143 = vld [vmem:[#allocation3 + $0x208] sm:$0xff]
    %v144 = vld [vmem:[#allocation3 + $0x210] sm:$0xff]
    %v145 = vld [vmem:[#allocation3 + $0x218] sm:$0xff]
    %v146 = vld [vmem:[#allocation3 + $0x220] sm:$0xff]
    %v147 = vld [vmem:[#allocation3 + $0x228] sm:$0xff]
    %v148 = vld [vmem:[#allocation3 + $0x230] sm:$0xff]
    %v149 = vld [vmem:[#allocation3 + $0x238] sm:$0xff]
    %v150 = vld [vmem:[#allocation3 + $0x240] sm:$0xff]
    %v151 = vld [vmem:[#allocation3 + $0x248] sm:$0xff]
    %v152 = vld [vmem:[#allocation3 + $0x250] sm:$0xff]
    %v153 = vld [vmem:[#allocation3 + $0x258] sm:$0xff]
    %v154 = vld [vmem:[#allocation3 + $0x260] sm:$0xff]
    %v155 = vld [vmem:[#allocation3 + $0x268] sm:$0xff]
    %v156 = vld [vmem:[#allocation3 + $0x270] sm:$0xff]
    %v157 = vld [vmem:[#allocation3 + $0x278] sm:$0xff]
    %v158 = vld [vmem:[#allocation3 + $0x280] sm:$0xff]
    %v159 = vld [vmem:[#allocation3 + $0x288] sm:$0xff]
    %v160 = vld [vmem:[#allocation3 + $0x290] sm:$0xff]
    %v161 = vld [vmem:[#allocation3 + $0x298] sm:$0xff]
    %v162 = vld [vmem:[#allocation3 + $0x2a0] sm:$0xff]
    %v163 = vld [vmem:[#allocation3 + $0x2a8] sm:$0xff]
    %v164 = vld [vmem:[#allocation3 + $0x2b0] sm:$0xff]
    %v165 = vld [vmem:[#allocation3 + $0x2b8] sm:$0xff]
    %v166 = vld [vmem:[#allocation3 + $0x2c0] sm:$0xff]
    %v167 = vld [vmem:[#allocation3 + $0x2c8] sm:$0xff]
    %v168 = vld [vmem:[#allocation3 + $0x2d0] sm:$0xff]
    %v169 = vld [vmem:[#allocation3 + $0x2d8] sm:$0xff]
    %v170 = vld [vmem:[#allocation3 + $0x2e0] sm:$0xff]
    %v171 = vld [vmem:[#allocation3 + $0x2e8] sm:$0xff]
    %v172 = vld [vmem:[#allocation3 + $0x2f0] sm:$0xff]
    %v173 = vld [vmem:[#allocation3 + $0x2f8] sm:$0xff]
    %v174 = vld [vmem:[#allocation3 + $0x300] sm:$0xff]
    %v175 = vld [vmem:[#allocation3 + $0x308] sm:$0xff]
    %v176 = vld [vmem:[#allocation3 + $0x310] sm:$0xff]
    %v177 = vld [vmem:[#allocation3 + $0x318] sm:$0xff]
    %v178 = vld [vmem:[#allocation3 + $0x320] sm:$0xff]
    %v179 = vld [vmem:[#allocation3 + $0x328] sm:$0xff]
    %v180 = vld [vmem:[#allocation3 + $0x330] sm:$0xff]
    %v181 = vld [vmem:[#allocation3 + $0x338] sm:$0xff]
    %v182 = vld [vmem:[#allocation3 + $0x340] sm:$0xff]
    %v183 = vld [vmem:[#allocation3 + $0x348] sm:$0xff]
    %v184 = vld [vmem:[#allocation3 + $0x350] sm:$0xff]
    %v185 = vld [vmem:[#allocation3 + $0x358] sm:$0xff]
    %v186 = vld [vmem:[#allocation3 + $0x360] sm:$0xff]
    %v187 = vld [vmem:[#allocation3 + $0x368] sm:$0xff]
    %v188 = vld [vmem:[#allocation3 + $0x370] sm:$0xff]
    %v189 = vld [vmem:[#allocation3 + $0x378] sm:$0xff]
    %v190 = vld [vmem:[#allocation3 + $0x380] sm:$0xff]
    %v191 = vld [vmem:[#allocation3 + $0x388] sm:$0xff]
    %v192 = vld [vmem:[#allocation3 + $0x390] sm:$0xff]
    %v193 = vld [vmem:[#allocation3 + $0x398] sm:$0xff]
    %v194 = vld [vmem:[#allocation3 + $0x3a0] sm:$0xff]
    %v195 = vld [vmem:[#allocation3 + $0x3a8] sm:$0xff]
    %v196 = vld [vmem:[#allocation3 + $0x3b0] sm:$0xff]
    %v197 = vld [vmem:[#allocation3 + $0x3b8] sm:$0xff]
    %v198 = vld [vmem:[#allocation3 + $0x3c0] sm:$0xff]
    %v199 = vld [vmem:[#allocation3 + $0x3c8] sm:$0xff]
    %v200 = vld [vmem:[#allocation3 + $0x3d0] sm:$0xff]
    %v201 = vld [vmem:[#allocation3 + $0x3d8] sm:$0xff]
    %v202 = vld [vmem:[#allocation3 + $0x3e0] sm:$0xff]
    %v203 = vld [vmem:[#allocation3 + $0x3e8] sm:$0xff]
    %v204 = vld [vmem:[#allocation3 + $0x3f0] sm:$0xff]
    %v205 = vld [vmem:[#allocation3 + $0x3f8] sm:$0xff]
    %v206 = vld [vmem:[#allocation3 + $0x400] sm:$0xff]
    %v207 = vld [vmem:[#allocation3 + $0x408] sm:$0xff]
    %v208 = vld [vmem:[#allocation3 + $0x410] sm:$0xff]
    %v209 = vld [vmem:[#allocation3 + $0x418] sm:$0xff]
    %v210 = vld [vmem:[#allocation3 + $0x420] sm:$0xff]
    %v211 = vld [vmem:[#allocation3 + $0x428] sm:$0xff]
    %v212 = vld [vmem:[#allocation3 + $0x430] sm:$0xff]
    %v213 = vld [vmem:[#allocation3 + $0x438] sm:$0xff]
    %v214 = vld [vmem:[#allocation3 + $0x440] sm:$0xff]
    %v215 = vld [vmem:[#allocation3 + $0x448] sm:$0xff]
    %v216 = vld [vmem:[#allocation3 + $0x450] sm:$0xff]
    %v217 = vld [vmem:[#allocation3 + $0x458] sm:$0xff]
    %v218 = vld [vmem:[#allocation3 + $0x460] sm:$0xff]
    %v219 = vld [vmem:[#allocation3 + $0x468] sm:$0xff]
    %v220 = vld [vmem:[#allocation3 + $0x470] sm:$0xff]
    %v221 = vld [vmem:[#allocation3 + $0x478] sm:$0xff]
    %v222 = vld [vmem:[#allocation3 + $0x480] sm:$0xff]
    %v223 = vld [vmem:[#allocation3 + $0x488] sm:$0xff]
    %v224 = vld [vmem:[#allocation3 + $0x490] sm:$0xff]
    %v225 = vld [vmem:[#allocation3 + $0x498] sm:$0xff]
    %v226 = vld [vmem:[#allocation3 + $0x4a0] sm:$0xff]
    %v227 = vld [vmem:[#allocation3 + $0x4a8] sm:$0xff]
    %v228 = vld [vmem:[#allocation3 + $0x4b0] sm:$0xff]
    %v229 = vld [vmem:[#allocation3 + $0x4b8] sm:$0xff]
    %v230 = vld [vmem:[#allocation3 + $0x4c0] sm:$0xff]
    %v231 = vld [vmem:[#allocation3 + $0x4c8] sm:$0xff]
    %v232 = vld [vmem:[#allocation3 + $0x4d0] sm:$0xff]
    %v233 = vld [vmem:[#allocation3 + $0x4d8] sm:$0xff]
    %v234 = vld [vmem:[#allocation3 + $0x4e0] sm:$0xff]
    %v235 = vld [vmem:[#allocation3 + $0x4e8] sm:$0xff]
    %v236 = vld [vmem:[#allocation3 + $0x4f0] sm:$0xff]
    %v237 = vld [vmem:[#allocation3 + $0x4f8] sm:$0xff]
    %v238 = vld [vmem:[#allocation3 + $0x500] sm:$0xff]
    %v239 = vld [vmem:[#allocation3 + $0x508] sm:$0xff]
    %v240 = vld [vmem:[#allocation3 + $0x510] sm:$0xff]
    %v241 = vld [vmem:[#allocation3 + $0x518] sm:$0xff]
    %v242 = vld [vmem:[#allocation3 + $0x520] sm:$0xff]
    %v243 = vld [vmem:[#allocation3 + $0x528] sm:$0xff]
    %v244 = vld [vmem:[#allocation3 + $0x530] sm:$0xff]
    %v245 = vld [vmem:[#allocation3 + $0x538] sm:$0xff]
    %v246 = vld [vmem:[#allocation3 + $0x540] sm:$0xff]
    %v247 = vld [vmem:[#allocation3 + $0x548] sm:$0xff]
    %v248 = vld [vmem:[#allocation3 + $0x550] sm:$0xff]
    %v249 = vld [vmem:[#allocation3 + $0x558] sm:$0xff]
    %v250 = vld [vmem:[#allocation3 + $0x560] sm:$0xff]
    %v251 = vld [vmem:[#allocation3 + $0x568] sm:$0xff]
    %v252 = vld [vmem:[#allocation3 + $0x570] sm:$0xff]
    %v253 = vld [vmem:[#allocation3 + $0x578] sm:$0xff]
    %v254 = vld [vmem:[#allocation3 + $0x580] sm:$0xff]
    %v255 = vld [vmem:[#allocation3 + $0x588] sm:$0xff]
    %v256 = vld [vmem:[#allocation3 + $0x590] sm:$0xff]
    %v257 = vld [vmem:[#allocation3 + $0x598] sm:$0xff]
    %v258 = vld [vmem:[#allocation3 + $0x5a0] sm:$0xff]
    %v259 = vld [vmem:[#allocation3 + $0x5a8] sm:$0xff]
    %v260 = vld [vmem:[#allocation3 + $0x5b0] sm:$0xff]
    %v261 = vld [vmem:[#allocation3 + $0x5b8] sm:$0xff]
    %v262 = vld [vmem:[#allocation3 + $0x5c0] sm:$0xff]
    %v263 = vld [vmem:[#allocation3 + $0x5c8] sm:$0xff]
    %v264 = vld [vmem:[#allocation3 + $0x5d0] sm:$0xff]
    %v265 = vld [vmem:[#allocation3 + $0x5d8] sm:$0xff]
    %v266 = vld [vmem:[#allocation3 + $0x5e0] sm:$0xff]
    %v267 = vld [vmem:[#allocation3 + $0x5e8] sm:$0xff]
    %v268 = vld [vmem:[#allocation3 + $0x5f0] sm:$0xff]
    %v269 = vld [vmem:[#allocation3 + $0x5f8] sm:$0xff]
    %v270 = vld [vmem:[%s3] sm:$0x3]
    %v272 = vlaneseq
    %v273 = vshrl.u32 %v272, 7
    %v274 = vsub.s32 0, %v273
    %v275 = vrot.slane %v270, %v274
    %v276 = vlaneseq
    %v277 = vshrl.u32 %v276, 7
    %v278 = vsub.s32 1, %v277
    %v279 = vrot.slane %v270, %v278
    %v294 = vunpack.c.l.b16 %v66
    %v295 = vunpack.c.h.b16 %v66
    %v296 = vunpack.c.l.b16 %v67
    %v297 = vunpack.c.h.b16 %v67
    %v298 = vunpack.c.l.b16 %v68
    %v299 = vunpack.c.h.b16 %v68
    %v300 = vunpack.c.l.b16 %v69
    %v301 = vunpack.c.h.b16 %v69
    %v302 = vunpack.c.l.b16 %v70
    %v303 = vunpack.c.h.b16 %v70
    %v304 = vunpack.c.l.b16 %v71
    %v305 = vunpack.c.h.b16 %v71
    %v306 = vunpack.c.l.b16 %v72
    %v307 = vunpack.c.h.b16 %v72
    %v308 = vunpack.c.l.b16 %v73
    %v309 = vunpack.c.h.b16 %v73
    %v310 = vunpack.c.l.b16 %v74
    %v311 = vunpack.c.h.b16 %v74
    %v312 = vunpack.c.l.b16 %v75
    %v313 = vunpack.c.h.b16 %v75
    %v314 = vunpack.c.l.b16 %v76
    %v315 = vunpack.c.h.b16 %v76
    %v316 = vunpack.c.l.b16 %v77
    %v317 = vunpack.c.h.b16 %v77
    %v318 = vpack.c.b16 %v306, %v294
    %v319 = vpack.c.b16 %v307, %v295
    %v320 = vpack.c.b16 %v308, %v296
    %v321 = vpack.c.b16 %v309, %v297
    %v322 = vpack.c.b16 %v310, %v298
    %v323 = vpack.c.b16 %v311, %v299
    %v324 = vpack.c.b16 %v312, %v300
    %v325 = vpack.c.b16 %v313, %v301
    %v326 = vpack.c.b16 %v314, %v302
    %v327 = vpack.c.b16 %v315, %v303
    %v328 = vpack.c.b16 %v316, %v304
    %v329 = vpack.c.b16 %v317, %v305
    %v534 = vunpack.c.l.b16 %v78
    %v535 = vunpack.c.h.b16 %v78
    %v536 = vunpack.c.l.b16 %v79
    %v537 = vunpack.c.h.b16 %v79
    %v538 = vunpack.c.l.b16 %v80
    %v539 = vunpack.c.h.b16 %v80
    %v540 = vunpack.c.l.b16 %v81
    %v541 = vunpack.c.h.b16 %v81
    %v542 = vunpack.c.l.b16 %v82
    %v543 = vunpack.c.h.b16 %v82
    %v544 = vunpack.c.l.b16 %v83
    %v545 = vunpack.c.h.b16 %v83
    %v546 = vunpack.c.l.b16 %v84
    %v547 = vunpack.c.h.b16 %v84
    %v548 = vunpack.c.l.b16 %v85
    %v549 = vunpack.c.h.b16 %v85
    %v550 = vunpack.c.l.b16 %v86
    %v551 = vunpack.c.h.b16 %v86
    %v552 = vunpack.c.l.b16 %v87
    %v553 = vunpack.c.h.b16 %v87
    %v554 = vunpack.c.l.b16 %v88
    %v555 = vunpack.c.h.b16 %v88
    %v556 = vunpack.c.l.b16 %v89
    %v557 = vunpack.c.h.b16 %v89
    %v558 = vunpack.c.l.b16 %v90
    %v559 = vunpack.c.h.b16 %v90
    %v560 = vunpack.c.l.b16 %v91
    %v561 = vunpack.c.h.b16 %v91
    %v562 = vunpack.c.l.b16 %v92
    %v563 = vunpack.c.h.b16 %v92
    %v564 = vunpack.c.l.b16 %v93
    %v565 = vunpack.c.h.b16 %v93
    %v566 = vunpack.c.l.b16 %v94
    %v567 = vunpack.c.h.b16 %v94
    %v568 = vunpack.c.l.b16 %v95
    %v569 = vunpack.c.h.b16 %v95
    %v570 = vunpack.c.l.b16 %v96
    %v571 = vunpack.c.h.b16 %v96
    %v572 = vunpack.c.l.b16 %v97
    %v573 = vunpack.c.h.b16 %v97
    %v574 = vunpack.c.l.b16 %v98
    %v575 = vunpack.c.h.b16 %v98
    %v576 = vunpack.c.l.b16 %v99
    %v577 = vunpack.c.h.b16 %v99
    %v578 = vunpack.c.l.b16 %v100
    %v579 = vunpack.c.h.b16 %v100
    %v580 = vunpack.c.l.b16 %v101
    %v581 = vunpack.c.h.b16 %v101
    %v582 = vunpack.c.l.b16 %v102
    %v583 = vunpack.c.h.b16 %v102
    %v584 = vunpack.c.l.b16 %v103
    %v585 = vunpack.c.h.b16 %v103
    %v586 = vunpack.c.l.b16 %v104
    %v587 = vunpack.c.h.b16 %v104
    %v588 = vunpack.c.l.b16 %v105
    %v589 = vunpack.c.h.b16 %v105
    %v590 = vunpack.c.l.b16 %v106
    %v591 = vunpack.c.h.b16 %v106
    %v592 = vunpack.c.l.b16 %v107
    %v593 = vunpack.c.h.b16 %v107
    %v594 = vunpack.c.l.b16 %v108
    %v595 = vunpack.c.h.b16 %v108
    %v596 = vunpack.c.l.b16 %v109
    %v597 = vunpack.c.h.b16 %v109
    %v598 = vunpack.c.l.b16 %v110
    %v599 = vunpack.c.h.b16 %v110
    %v600 = vunpack.c.l.b16 %v111
    %v601 = vunpack.c.h.b16 %v111
    %v602 = vunpack.c.l.b16 %v112
    %v603 = vunpack.c.h.b16 %v112
    %v604 = vunpack.c.l.b16 %v113
    %v605 = vunpack.c.h.b16 %v113
    %v606 = vunpack.c.l.b16 %v114
    %v607 = vunpack.c.h.b16 %v114
    %v608 = vunpack.c.l.b16 %v115
    %v609 = vunpack.c.h.b16 %v115
    %v610 = vunpack.c.l.b16 %v116
    %v611 = vunpack.c.h.b16 %v116
    %v612 = vunpack.c.l.b16 %v117
    %v613 = vunpack.c.h.b16 %v117
    %v614 = vunpack.c.l.b16 %v118
    %v615 = vunpack.c.h.b16 %v118
    %v616 = vunpack.c.l.b16 %v119
    %v617 = vunpack.c.h.b16 %v119
    %v618 = vunpack.c.l.b16 %v120
    %v619 = vunpack.c.h.b16 %v120
    %v620 = vunpack.c.l.b16 %v121
    %v621 = vunpack.c.h.b16 %v121
    %v622 = vunpack.c.l.b16 %v122
    %v623 = vunpack.c.h.b16 %v122
    %v624 = vunpack.c.l.b16 %v123
    %v625 = vunpack.c.h.b16 %v123
    %v626 = vunpack.c.l.b16 %v124
    %v627 = vunpack.c.h.b16 %v124
    %v628 = vunpack.c.l.b16 %v125
    %v629 = vunpack.c.h.b16 %v125
    %v630 = vunpack.c.l.b16 %v126
    %v631 = vunpack.c.h.b16 %v126
    %v632 = vunpack.c.l.b16 %v127
    %v633 = vunpack.c.h.b16 %v127
    %v634 = vunpack.c.l.b16 %v128
    %v635 = vunpack.c.h.b16 %v128
    %v636 = vunpack.c.l.b16 %v129
    %v637 = vunpack.c.h.b16 %v129
    %v638 = vunpack.c.l.b16 %v130
    %v639 = vunpack.c.h.b16 %v130
    %v640 = vunpack.c.l.b16 %v131
    %v641 = vunpack.c.h.b16 %v131
    %v642 = vunpack.c.l.b16 %v132
    %v643 = vunpack.c.h.b16 %v132
    %v644 = vunpack.c.l.b16 %v133
    %v645 = vunpack.c.h.b16 %v133
    %v646 = vunpack.c.l.b16 %v134
    %v647 = vunpack.c.h.b16 %v134
    %v648 = vunpack.c.l.b16 %v135
    %v649 = vunpack.c.h.b16 %v135
    %v650 = vunpack.c.l.b16 %v136
    %v651 = vunpack.c.h.b16 %v136
    %v652 = vunpack.c.l.b16 %v137
    %v653 = vunpack.c.h.b16 %v137
    %v654 = vunpack.c.l.b16 %v138
    %v655 = vunpack.c.h.b16 %v138
    %v656 = vunpack.c.l.b16 %v139
    %v657 = vunpack.c.h.b16 %v139
    %v658 = vunpack.c.l.b16 %v140
    %v659 = vunpack.c.h.b16 %v140
    %v660 = vunpack.c.l.b16 %v141
    %v661 = vunpack.c.h.b16 %v141
    %v662 = vunpack.c.l.b16 %v142
    %v663 = vunpack.c.h.b16 %v142
    %v664 = vunpack.c.l.b16 %v143
    %v665 = vunpack.c.h.b16 %v143
    %v666 = vunpack.c.l.b16 %v144
    %v667 = vunpack.c.h.b16 %v144
    %v668 = vunpack.c.l.b16 %v145
    %v669 = vunpack.c.h.b16 %v145
    %v670 = vunpack.c.l.b16 %v146
    %v671 = vunpack.c.h.b16 %v146
    %v672 = vunpack.c.l.b16 %v147
    %v673 = vunpack.c.h.b16 %v147
    %v674 = vunpack.c.l.b16 %v148
    %v675 = vunpack.c.h.b16 %v148
    %v676 = vunpack.c.l.b16 %v149
    %v677 = vunpack.c.h.b16 %v149
    %v678 = vunpack.c.l.b16 %v150
    %v679 = vunpack.c.h.b16 %v150
    %v680 = vunpack.c.l.b16 %v151
    %v681 = vunpack.c.h.b16 %v151
    %v682 = vunpack.c.l.b16 %v152
    %v683 = vunpack.c.h.b16 %v152
    %v684 = vunpack.c.l.b16 %v153
    %v685 = vunpack.c.h.b16 %v153
    %v686 = vunpack.c.l.b16 %v154
    %v687 = vunpack.c.h.b16 %v154
    %v688 = vunpack.c.l.b16 %v155
    %v689 = vunpack.c.h.b16 %v155
    %v690 = vunpack.c.l.b16 %v156
    %v691 = vunpack.c.h.b16 %v156
    %v692 = vunpack.c.l.b16 %v157
    %v693 = vunpack.c.h.b16 %v157
    %v694 = vunpack.c.l.b16 %v158
    %v695 = vunpack.c.h.b16 %v158
    %v696 = vunpack.c.l.b16 %v159
    %v697 = vunpack.c.h.b16 %v159
    %v698 = vunpack.c.l.b16 %v160
    %v699 = vunpack.c.h.b16 %v160
    %v700 = vunpack.c.l.b16 %v161
    %v701 = vunpack.c.h.b16 %v161
    %v702 = vunpack.c.l.b16 %v162
    %v703 = vunpack.c.h.b16 %v162
    %v704 = vunpack.c.l.b16 %v163
    %v705 = vunpack.c.h.b16 %v163
    %v706 = vunpack.c.l.b16 %v164
    %v707 = vunpack.c.h.b16 %v164
    %v708 = vunpack.c.l.b16 %v165
    %v709 = vunpack.c.h.b16 %v165
    %v710 = vunpack.c.l.b16 %v166
    %v711 = vunpack.c.h.b16 %v166
    %v712 = vunpack.c.l.b16 %v167
    %v713 = vunpack.c.h.b16 %v167
    %v714 = vunpack.c.l.b16 %v168
    %v715 = vunpack.c.h.b16 %v168
    %v716 = vunpack.c.l.b16 %v169
    %v717 = vunpack.c.h.b16 %v169
    %v718 = vunpack.c.l.b16 %v170
    %v719 = vunpack.c.h.b16 %v170
    %v720 = vunpack.c.l.b16 %v171
    %v721 = vunpack.c.h.b16 %v171
    %v722 = vunpack.c.l.b16 %v172
    %v723 = vunpack.c.h.b16 %v172
    %v724 = vunpack.c.l.b16 %v173
    %v725 = vunpack.c.h.b16 %v173
    %v726 = vunpack.c.l.b16 %v174
    %v727 = vunpack.c.h.b16 %v174
    %v728 = vunpack.c.l.b16 %v175
    %v729 = vunpack.c.h.b16 %v175
    %v730 = vunpack.c.l.b16 %v176
    %v731 = vunpack.c.h.b16 %v176
    %v732 = vunpack.c.l.b16 %v177
    %v733 = vunpack.c.h.b16 %v177
    %v734 = vunpack.c.l.b16 %v178
    %v735 = vunpack.c.h.b16 %v178
    %v736 = vunpack.c.l.b16 %v179
    %v737 = vunpack.c.h.b16 %v179
    %v738 = vunpack.c.l.b16 %v180
    %v739 = vunpack.c.h.b16 %v180
    %v740 = vunpack.c.l.b16 %v181
    %v741 = vunpack.c.h.b16 %v181
    %v742 = vunpack.c.l.b16 %v182
    %v743 = vunpack.c.h.b16 %v182
    %v744 = vunpack.c.l.b16 %v183
    %v745 = vunpack.c.h.b16 %v183
    %v746 = vunpack.c.l.b16 %v184
    %v747 = vunpack.c.h.b16 %v184
    %v748 = vunpack.c.l.b16 %v185
    %v749 = vunpack.c.h.b16 %v185
    %v750 = vunpack.c.l.b16 %v186
    %v751 = vunpack.c.h.b16 %v186
    %v752 = vunpack.c.l.b16 %v187
    %v753 = vunpack.c.h.b16 %v187
    %v754 = vunpack.c.l.b16 %v188
    %v755 = vunpack.c.h.b16 %v188
    %v756 = vunpack.c.l.b16 %v189
    %v757 = vunpack.c.h.b16 %v189
    %v758 = vunpack.c.l.b16 %v190
    %v759 = vunpack.c.h.b16 %v190
    %v760 = vunpack.c.l.b16 %v191
    %v761 = vunpack.c.h.b16 %v191
    %v762 = vunpack.c.l.b16 %v192
    %v763 = vunpack.c.h.b16 %v192
    %v764 = vunpack.c.l.b16 %v193
    %v765 = vunpack.c.h.b16 %v193
    %v766 = vunpack.c.l.b16 %v194
    %v767 = vunpack.c.h.b16 %v194
    %v768 = vunpack.c.l.b16 %v195
    %v769 = vunpack.c.h.b16 %v195
    %v770 = vunpack.c.l.b16 %v196
    %v771 = vunpack.c.h.b16 %v196
    %v772 = vunpack.c.l.b16 %v197
    %v773 = vunpack.c.h.b16 %v197
    %v774 = vunpack.c.l.b16 %v198
    %v775 = vunpack.c.h.b16 %v198
    %v776 = vunpack.c.l.b16 %v199
    %v777 = vunpack.c.h.b16 %v199
    %v778 = vunpack.c.l.b16 %v200
    %v779 = vunpack.c.h.b16 %v200
    %v780 = vunpack.c.l.b16 %v201
    %v781 = vunpack.c.h.b16 %v201
    %v782 = vunpack.c.l.b16 %v202
    %v783 = vunpack.c.h.b16 %v202
    %v784 = vunpack.c.l.b16 %v203
    %v785 = vunpack.c.h.b16 %v203
    %v786 = vunpack.c.l.b16 %v204
    %v787 = vunpack.c.h.b16 %v204
    %v788 = vunpack.c.l.b16 %v205
    %v789 = vunpack.c.h.b16 %v205
    %v790 = vunpack.c.l.b16 %v206
    %v791 = vunpack.c.h.b16 %v206
    %v792 = vunpack.c.l.b16 %v207
    %v793 = vunpack.c.h.b16 %v207
    %v794 = vunpack.c.l.b16 %v208
    %v795 = vunpack.c.h.b16 %v208
    %v796 = vunpack.c.l.b16 %v209
    %v797 = vunpack.c.h.b16 %v209
    %v798 = vunpack.c.l.b16 %v210
    %v799 = vunpack.c.h.b16 %v210
    %v800 = vunpack.c.l.b16 %v211
    %v801 = vunpack.c.h.b16 %v211
    %v802 = vunpack.c.l.b16 %v212
    %v803 = vunpack.c.h.b16 %v212
    %v804 = vunpack.c.l.b16 %v213
    %v805 = vunpack.c.h.b16 %v213
    %v806 = vunpack.c.l.b16 %v214
    %v807 = vunpack.c.h.b16 %v214
    %v808 = vunpack.c.l.b16 %v215
    %v809 = vunpack.c.h.b16 %v215
    %v810 = vunpack.c.l.b16 %v216
    %v811 = vunpack.c.h.b16 %v216
    %v812 = vunpack.c.l.b16 %v217
    %v813 = vunpack.c.h.b16 %v217
    %v814 = vunpack.c.l.b16 %v218
    %v815 = vunpack.c.h.b16 %v218
    %v816 = vunpack.c.l.b16 %v219
    %v817 = vunpack.c.h.b16 %v219
    %v818 = vunpack.c.l.b16 %v220
    %v819 = vunpack.c.h.b16 %v220
    %v820 = vunpack.c.l.b16 %v221
    %v821 = vunpack.c.h.b16 %v221
    %v822 = vunpack.c.l.b16 %v222
    %v823 = vunpack.c.h.b16 %v222
    %v824 = vunpack.c.l.b16 %v223
    %v825 = vunpack.c.h.b16 %v223
    %v826 = vunpack.c.l.b16 %v224
    %v827 = vunpack.c.h.b16 %v224
    %v828 = vunpack.c.l.b16 %v225
    %v829 = vunpack.c.h.b16 %v225
    %v830 = vunpack.c.l.b16 %v226
    %v831 = vunpack.c.h.b16 %v226
    %v832 = vunpack.c.l.b16 %v227
    %v833 = vunpack.c.h.b16 %v227
    %v834 = vunpack.c.l.b16 %v228
    %v835 = vunpack.c.h.b16 %v228
    %v836 = vunpack.c.l.b16 %v229
    %v837 = vunpack.c.h.b16 %v229
    %v838 = vunpack.c.l.b16 %v230
    %v839 = vunpack.c.h.b16 %v230
    %v840 = vunpack.c.l.b16 %v231
    %v841 = vunpack.c.h.b16 %v231
    %v842 = vunpack.c.l.b16 %v232
    %v843 = vunpack.c.h.b16 %v232
    %v844 = vunpack.c.l.b16 %v233
    %v845 = vunpack.c.h.b16 %v233
    %v846 = vunpack.c.l.b16 %v234
    %v847 = vunpack.c.h.b16 %v234
    %v848 = vunpack.c.l.b16 %v235
    %v849 = vunpack.c.h.b16 %v235
    %v850 = vunpack.c.l.b16 %v236
    %v851 = vunpack.c.h.b16 %v236
    %v852 = vunpack.c.l.b16 %v237
    %v853 = vunpack.c.h.b16 %v237
    %v854 = vunpack.c.l.b16 %v238
    %v855 = vunpack.c.h.b16 %v238
    %v856 = vunpack.c.l.b16 %v239
    %v857 = vunpack.c.h.b16 %v239
    %v858 = vunpack.c.l.b16 %v240
    %v859 = vunpack.c.h.b16 %v240
    %v860 = vunpack.c.l.b16 %v241
    %v861 = vunpack.c.h.b16 %v241
    %v862 = vunpack.c.l.b16 %v242
    %v863 = vunpack.c.h.b16 %v242
    %v864 = vunpack.c.l.b16 %v243
    %v865 = vunpack.c.h.b16 %v243
    %v866 = vunpack.c.l.b16 %v244
    %v867 = vunpack.c.h.b16 %v244
    %v868 = vunpack.c.l.b16 %v245
    %v869 = vunpack.c.h.b16 %v245
    %v870 = vunpack.c.l.b16 %v246
    %v871 = vunpack.c.h.b16 %v246
    %v872 = vunpack.c.l.b16 %v247
    %v873 = vunpack.c.h.b16 %v247
    %v874 = vunpack.c.l.b16 %v248
    %v875 = vunpack.c.h.b16 %v248
    %v876 = vunpack.c.l.b16 %v249
    %v877 = vunpack.c.h.b16 %v249
    %v878 = vunpack.c.l.b16 %v250
    %v879 = vunpack.c.h.b16 %v250
    %v880 = vunpack.c.l.b16 %v251
    %v881 = vunpack.c.h.b16 %v251
    %v882 = vunpack.c.l.b16 %v252
    %v883 = vunpack.c.h.b16 %v252
    %v884 = vunpack.c.l.b16 %v253
    %v885 = vunpack.c.h.b16 %v253
    %v886 = vunpack.c.l.b16 %v254
    %v887 = vunpack.c.h.b16 %v254
    %v888 = vunpack.c.l.b16 %v255
    %v889 = vunpack.c.h.b16 %v255
    %v890 = vunpack.c.l.b16 %v256
    %v891 = vunpack.c.h.b16 %v256
    %v892 = vunpack.c.l.b16 %v257
    %v893 = vunpack.c.h.b16 %v257
    %v894 = vunpack.c.l.b16 %v258
    %v895 = vunpack.c.h.b16 %v258
    %v896 = vunpack.c.l.b16 %v259
    %v897 = vunpack.c.h.b16 %v259
    %v898 = vunpack.c.l.b16 %v260
    %v899 = vunpack.c.h.b16 %v260
    %v900 = vunpack.c.l.b16 %v261
    %v901 = vunpack.c.h.b16 %v261
    %v902 = vunpack.c.l.b16 %v262
    %v903 = vunpack.c.h.b16 %v262
    %v904 = vunpack.c.l.b16 %v263
    %v905 = vunpack.c.h.b16 %v263
    %v906 = vunpack.c.l.b16 %v264
    %v907 = vunpack.c.h.b16 %v264
    %v908 = vunpack.c.l.b16 %v265
    %v909 = vunpack.c.h.b16 %v265
    %v910 = vunpack.c.l.b16 %v266
    %v911 = vunpack.c.h.b16 %v266
    %v912 = vunpack.c.l.b16 %v267
    %v913 = vunpack.c.h.b16 %v267
    %v914 = vunpack.c.l.b16 %v268
    %v915 = vunpack.c.h.b16 %v268
    %v916 = vunpack.c.l.b16 %v269
    %v917 = vunpack.c.h.b16 %v269
    %v918 = vpack.c.b16 %v536, %v534
    %v919 = vpack.c.b16 %v537, %v535
    %v920 = vpack.c.b16 %v540, %v538
    %v921 = vpack.c.b16 %v541, %v539
    %v922 = vpack.c.b16 %v544, %v542
    %v923 = vpack.c.b16 %v545, %v543
    %v924 = vpack.c.b16 %v548, %v546
    %v925 = vpack.c.b16 %v549, %v547
    %v926 = vpack.c.b16 %v552, %v550
    %v927 = vpack.c.b16 %v553, %v551
    %v928 = vpack.c.b16 %v556, %v554
    %v929 = vpack.c.b16 %v557, %v555
    %v930 = vpack.c.b16 %v560, %v558
    %v931 = vpack.c.b16 %v561, %v559
    %v932 = vpack.c.b16 %v564, %v562
    %v933 = vpack.c.b16 %v565, %v563
    %v934 = vpack.c.b16 %v568, %v566
    %v935 = vpack.c.b16 %v569, %v567
    %v936 = vpack.c.b16 %v572, %v570
    %v937 = vpack.c.b16 %v573, %v571
    %v938 = vpack.c.b16 %v576, %v574
    %v939 = vpack.c.b16 %v577, %v575
    %v940 = vpack.c.b16 %v580, %v578
    %v941 = vpack.c.b16 %v581, %v579
    %v942 = vpack.c.b16 %v584, %v582
    %v943 = vpack.c.b16 %v585, %v583
    %v944 = vpack.c.b16 %v588, %v586
    %v945 = vpack.c.b16 %v589, %v587
    %v946 = vpack.c.b16 %v592, %v590
    %v947 = vpack.c.b16 %v593, %v591
    %v948 = vpack.c.b16 %v596, %v594
    %v949 = vpack.c.b16 %v597, %v595
    %v950 = vpack.c.b16 %v600, %v598
    %v951 = vpack.c.b16 %v601, %v599
    %v952 = vpack.c.b16 %v604, %v602
    %v953 = vpack.c.b16 %v605, %v603
    %v954 = vpack.c.b16 %v608, %v606
    %v955 = vpack.c.b16 %v609, %v607
    %v956 = vpack.c.b16 %v612, %v610
    %v957 = vpack.c.b16 %v613, %v611
    %v958 = vpack.c.b16 %v616, %v614
    %v959 = vpack.c.b16 %v617, %v615
    %v960 = vpack.c.b16 %v620, %v618
    %v961 = vpack.c.b16 %v621, %v619
    %v962 = vpack.c.b16 %v624, %v622
    %v963 = vpack.c.b16 %v625, %v623
    %v964 = vpack.c.b16 %v628, %v626
    %v965 = vpack.c.b16 %v629, %v627
    %v966 = vpack.c.b16 %v632, %v630
    %v967 = vpack.c.b16 %v633, %v631
    %v968 = vpack.c.b16 %v636, %v634
    %v969 = vpack.c.b16 %v637, %v635
    %v970 = vpack.c.b16 %v640, %v638
    %v971 = vpack.c.b16 %v641, %v639
    %v972 = vpack.c.b16 %v644, %v642
    %v973 = vpack.c.b16 %v645, %v643
    %v974 = vpack.c.b16 %v648, %v646
    %v975 = vpack.c.b16 %v649, %v647
    %v976 = vpack.c.b16 %v652, %v650
    %v977 = vpack.c.b16 %v653, %v651
    %v978 = vpack.c.b16 %v656, %v654
    %v979 = vpack.c.b16 %v657, %v655
    %v980 = vpack.c.b16 %v660, %v658
    %v981 = vpack.c.b16 %v661, %v659
    %v982 = vpack.c.b16 %v664, %v662
    %v983 = vpack.c.b16 %v665, %v663
    %v984 = vpack.c.b16 %v668, %v666
    %v985 = vpack.c.b16 %v669, %v667
    %v986 = vpack.c.b16 %v672, %v670
    %v987 = vpack.c.b16 %v673, %v671
    %v988 = vpack.c.b16 %v676, %v674
    %v989 = vpack.c.b16 %v677, %v675
    %v990 = vpack.c.b16 %v680, %v678
    %v991 = vpack.c.b16 %v681, %v679
    %v992 = vpack.c.b16 %v684, %v682
    %v993 = vpack.c.b16 %v685, %v683
    %v994 = vpack.c.b16 %v688, %v686
    %v995 = vpack.c.b16 %v689, %v687
    %v996 = vpack.c.b16 %v692, %v690
    %v997 = vpack.c.b16 %v693, %v691
    %v998 = vpack.c.b16 %v696, %v694
    %v999 = vpack.c.b16 %v697, %v695
    %v1000 = vpack.c.b16 %v700, %v698
    %v1001 = vpack.c.b16 %v701, %v699
    %v1002 = vpack.c.b16 %v704, %v702
    %v1003 = vpack.c.b16 %v705, %v703
    %v1004 = vpack.c.b16 %v708, %v706
    %v1005 = vpack.c.b16 %v709, %v707
    %v1006 = vpack.c.b16 %v712, %v710
    %v1007 = vpack.c.b16 %v713, %v711
    %v1008 = vpack.c.b16 %v716, %v714
    %v1009 = vpack.c.b16 %v717, %v715
    %v1010 = vpack.c.b16 %v720, %v718
    %v1011 = vpack.c.b16 %v721, %v719
    %v1012 = vpack.c.b16 %v724, %v722
    %v1013 = vpack.c.b16 %v725, %v723
    %v1014 = vpack.c.b16 %v728, %v726
    %v1015 = vpack.c.b16 %v729, %v727
    %v1016 = vpack.c.b16 %v732, %v730
    %v1017 = vpack.c.b16 %v733, %v731
    %v1018 = vpack.c.b16 %v736, %v734
    %v1019 = vpack.c.b16 %v737, %v735
    %v1020 = vpack.c.b16 %v740, %v738
    %v1021 = vpack.c.b16 %v741, %v739
    %v1022 = vpack.c.b16 %v744, %v742
    %v1023 = vpack.c.b16 %v745, %v743
    %v1024 = vpack.c.b16 %v748, %v746
    %v1025 = vpack.c.b16 %v749, %v747
    %v1026 = vpack.c.b16 %v752, %v750
    %v1027 = vpack.c.b16 %v753, %v751
    %v1028 = vpack.c.b16 %v756, %v754
    %v1029 = vpack.c.b16 %v757, %v755
    %v1030 = vpack.c.b16 %v760, %v758
    %v1031 = vpack.c.b16 %v761, %v759
    %v1032 = vpack.c.b16 %v764, %v762
    %v1033 = vpack.c.b16 %v765, %v763
    %v1034 = vpack.c.b16 %v768, %v766
    %v1035 = vpack.c.b16 %v769, %v767
    %v1036 = vpack.c.b16 %v772, %v770
    %v1037 = vpack.c.b16 %v773, %v771
    %v1038 = vpack.c.b16 %v776, %v774
    %v1039 = vpack.c.b16 %v777, %v775
    %v1040 = vpack.c.b16 %v780, %v778
    %v1041 = vpack.c.b16 %v781, %v779
    %v1042 = vpack.c.b16 %v784, %v782
    %v1043 = vpack.c.b16 %v785, %v783
    %v1044 = vpack.c.b16 %v788, %v786
    %v1045 = vpack.c.b16 %v789, %v787
    %v1046 = vpack.c.b16 %v792, %v790
    %v1047 = vpack.c.b16 %v793, %v791
    %v1048 = vpack.c.b16 %v796, %v794
    %v1049 = vpack.c.b16 %v797, %v795
    %v1050 = vpack.c.b16 %v800, %v798
    %v1051 = vpack.c.b16 %v801, %v799
    %v1052 = vpack.c.b16 %v804, %v802
    %v1053 = vpack.c.b16 %v805, %v803
    %v1054 = vpack.c.b16 %v808, %v806
    %v1055 = vpack.c.b16 %v809, %v807
    %v1056 = vpack.c.b16 %v812, %v810
    %v1057 = vpack.c.b16 %v813, %v811
    %v1058 = vpack.c.b16 %v816, %v814
    %v1059 = vpack.c.b16 %v817, %v815
    %v1060 = vpack.c.b16 %v820, %v818
    %v1061 = vpack.c.b16 %v821, %v819
    %v1062 = vpack.c.b16 %v824, %v822
    %v1063 = vpack.c.b16 %v825, %v823
    %v1064 = vpack.c.b16 %v828, %v826
    %v1065 = vpack.c.b16 %v829, %v827
    %v1066 = vpack.c.b16 %v832, %v830
    %v1067 = vpack.c.b16 %v833, %v831
    %v1068 = vpack.c.b16 %v836, %v834
    %v1069 = vpack.c.b16 %v837, %v835
    %v1070 = vpack.c.b16 %v840, %v838
    %v1071 = vpack.c.b16 %v841, %v839
    %v1072 = vpack.c.b16 %v844, %v842
    %v1073 = vpack.c.b16 %v845, %v843
    %v1074 = vpack.c.b16 %v848, %v846
    %v1075 = vpack.c.b16 %v849, %v847
    %v1076 = vpack.c.b16 %v852, %v850
    %v1077 = vpack.c.b16 %v853, %v851
    %v1078 = vpack.c.b16 %v856, %v854
    %v1079 = vpack.c.b16 %v857, %v855
    %v1080 = vpack.c.b16 %v860, %v858
    %v1081 = vpack.c.b16 %v861, %v859
    %v1082 = vpack.c.b16 %v864, %v862
    %v1083 = vpack.c.b16 %v865, %v863
    %v1084 = vpack.c.b16 %v868, %v866
    %v1085 = vpack.c.b16 %v869, %v867
    %v1086 = vpack.c.b16 %v872, %v870
    %v1087 = vpack.c.b16 %v873, %v871
    %v1088 = vpack.c.b16 %v876, %v874
    %v1089 = vpack.c.b16 %v877, %v875
    %v1090 = vpack.c.b16 %v880, %v878
    %v1091 = vpack.c.b16 %v881, %v879
    %v1092 = vpack.c.b16 %v884, %v882
    %v1093 = vpack.c.b16 %v885, %v883
    %v1094 = vpack.c.b16 %v888, %v886
    %v1095 = vpack.c.b16 %v889, %v887
    %v1096 = vpack.c.b16 %v892, %v890
    %v1097 = vpack.c.b16 %v893, %v891
    %v1098 = vpack.c.b16 %v896, %v894
    %v1099 = vpack.c.b16 %v897, %v895
    %v1100 = vpack.c.b16 %v900, %v898
    %v1101 = vpack.c.b16 %v901, %v899
    %v1102 = vpack.c.b16 %v904, %v902
    %v1103 = vpack.c.b16 %v905, %v903
    %v1104 = vpack.c.b16 %v908, %v906
    %v1105 = vpack.c.b16 %v909, %v907
    %v1106 = vpack.c.b16 %v912, %v910
    %v1107 = vpack.c.b16 %v913, %v911
    %v1108 = vpack.c.b16 %v916, %v914
    %v1109 = vpack.c.b16 %v917, %v915
    %1302 = vmatprep.subr.bf16.mxu0 %v919
    %1303 = vmatpush1.bf16.msra.mxu0 %v918
    %1304 = vmatprep.subr.bf16.mxu0 %v921
    %1305 = vmatpush1.bf16.msra.mxu0 %v920
    %1306 = vmatprep.subr.bf16.mxu0 %v923
    %1307 = vmatpush1.bf16.msra.mxu0 %v922
    %1308 = vmatprep.subr.bf16.mxu0 %v925
    %1309 = vmatpush1.bf16.msra.mxu0 %v924
    %1310 = vmatprep.subr.bf16.mxu0 %v927
    %1311 = vmatpush1.bf16.msra.mxu0 %v926
    %1312 = vmatprep.subr.bf16.mxu0 %v929
    %1313 = vmatpush1.bf16.msra.mxu0 %v928
    %1314 = vmatprep.subr.bf16.mxu0 %v931
    %1315 = vmatpush1.bf16.msra.mxu0 %v930
    %1316 = vmatprep.subr.bf16.mxu0 %v933
    %1317 = vmatpush1.bf16.msra.mxu0 %v932
    %1318 = vmatprep.subr.bf16.mxu0 %v935
    %1319 = vmatpush1.bf16.msra.mxu0 %v934
    %1320 = vmatprep.subr.bf16.mxu0 %v937
    %1321 = vmatpush1.bf16.msra.mxu0 %v936
    %1322 = vmatprep.subr.bf16.mxu0 %v939
    %1323 = vmatpush1.bf16.msra.mxu0 %v938
    %1324 = vmatprep.subr.bf16.mxu0 %v941
    %1325 = vmatpush1.bf16.msra.mxu0 %v940
    %1326 = vmatprep.subr.bf16.mxu0 %v943
    %1327 = vmatpush1.bf16.msra.mxu0 %v942
    %1328 = vmatprep.subr.bf16.mxu0 %v945
    %1329 = vmatpush1.bf16.msra.mxu0 %v944
    %1330 = vmatprep.subr.bf16.mxu0 %v947
    %1331 = vmatpush1.bf16.msra.mxu0 %v946
    %1332 = vmatprep.subr.bf16.mxu0 %v949
    %1333 = vmatpush1.bf16.msra.mxu0 %v948
    %1334 = vmatprep.mubr.bf16.mxu0 %v319
    %1335 = vmatmul.mubr.bf16.gmra.mrb[0].mxu0 %v318
    %v1336 = vpop.f32.mrb[0].mxu0
    %v1337 = vadd.f32 %v275, %v1336
    %v1338 = vpop.f32.mrb[0].mxu0
    %v1339 = vadd.f32 %v279, %v1338
    %v1340 = vpop.f32.mrb[0].mxu0
    %v1341 = vadd.f32 %v275, %v1340
    %v1342 = vpop.f32.mrb[0].mxu0
    %v1343 = vadd.f32 %v279, %v1342
    %1344 = vdwg.mxu0
    %1345 = vmatprep.subr.bf16.mxu0 %v951
    %1346 = vmatpush1.bf16.msra.mxu0 %v950
    %1347 = vmatprep.subr.bf16.mxu0 %v953
    %1348 = vmatpush1.bf16.msra.mxu0 %v952
    %1349 = vmatprep.subr.bf16.mxu0 %v955
    %1350 = vmatpush1.bf16.msra.mxu0 %v954
    %1351 = vmatprep.subr.bf16.mxu0 %v957
    %1352 = vmatpush1.bf16.msra.mxu0 %v956
    %1353 = vmatprep.subr.bf16.mxu0 %v959
    %1354 = vmatpush1.bf16.msra.mxu0 %v958
    %1355 = vmatprep.subr.bf16.mxu0 %v961
    %1356 = vmatpush1.bf16.msra.mxu0 %v960
    %1357 = vmatprep.subr.bf16.mxu0 %v963
    %1358 = vmatpush1.bf16.msra.mxu0 %v962
    %1359 = vmatprep.subr.bf16.mxu0 %v965
    %1360 = vmatpush1.bf16.msra.mxu0 %v964
    %1361 = vmatprep.subr.bf16.mxu0 %v967
    %1362 = vmatpush1.bf16.msra.mxu0 %v966
    %1363 = vmatprep.subr.bf16.mxu0 %v969
    %1364 = vmatpush1.bf16.msra.mxu0 %v968
    %1365 = vmatprep.subr.bf16.mxu0 %v971
    %1366 = vmatpush1.bf16.msra.mxu0 %v970
    %1367 = vmatprep.subr.bf16.mxu0 %v973
    %1368 = vmatpush1.bf16.msra.mxu0 %v972
    %1369 = vmatprep.subr.bf16.mxu0 %v975
    %1370 = vmatpush1.bf16.msra.mxu0 %v974
    %1371 = vmatprep.subr.bf16.mxu0 %v977
    %1372 = vmatpush1.bf16.msra.mxu0 %v976
    %1373 = vmatprep.subr.bf16.mxu0 %v979
    %1374 = vmatpush1.bf16.msra.mxu0 %v978
    %1375 = vmatprep.subr.bf16.mxu0 %v981
    %1376 = vmatpush1.bf16.msra.mxu0 %v980
    %1377 = vmatprep.mubr.bf16.mxu0 %v321
    %1378 = vmatmul.mubr.bf16.gmra.mrb[0].mxu0 %v320
    %v1379 = vpop.f32.mrb[0].mxu0
    %v1380 = vadd.f32 %v1337, %v1379
    %v1381 = vpop.f32.mrb[0].mxu0
    %v1382 = vadd.f32 %v1339, %v1381
    %v1383 = vpop.f32.mrb[0].mxu0
    %v1384 = vadd.f32 %v1341, %v1383
    %v1385 = vpop.f32.mrb[0].mxu0
    %v1386 = vadd.f32 %v1343, %v1385
    %1387 = vdwg.mxu0
    %1388 = vmatprep.subr.bf16.mxu0 %v983
    %1389 = vmatpush1.bf16.msra.mxu0 %v982
    %1390 = vmatprep.subr.bf16.mxu0 %v985
    %1391 = vmatpush1.bf16.msra.mxu0 %v984
    %1392 = vmatprep.subr.bf16.mxu0 %v987
    %1393 = vmatpush1.bf16.msra.mxu0 %v986
    %1394 = vmatprep.subr.bf16.mxu0 %v989
    %1395 = vmatpush1.bf16.msra.mxu0 %v988
    %1396 = vmatprep.subr.bf16.mxu0 %v991
    %1397 = vmatpush1.bf16.msra.mxu0 %v990
    %1398 = vmatprep.subr.bf16.mxu0 %v993
    %1399 = vmatpush1.bf16.msra.mxu0 %v992
    %1400 = vmatprep.subr.bf16.mxu0 %v995
    %1401 = vmatpush1.bf16.msra.mxu0 %v994
    %1402 = vmatprep.subr.bf16.mxu0 %v997
    %1403 = vmatpush1.bf16.msra.mxu0 %v996
    %1404 = vmatprep.subr.bf16.mxu0 %v999
    %1405 = vmatpush1.bf16.msra.mxu0 %v998
    %1406 = vmatprep.subr.bf16.mxu0 %v1001
    %1407 = vmatpush1.bf16.msra.mxu0 %v1000
    %1408 = vmatprep.subr.bf16.mxu0 %v1003
    %1409 = vmatpush1.bf16.msra.mxu0 %v1002
    %1410 = vmatprep.subr.bf16.mxu0 %v1005
    %1411 = vmatpush1.bf16.msra.mxu0 %v1004
    %1412 = vmatprep.subr.bf16.mxu0 %v1007
    %1413 = vmatpush1.bf16.msra.mxu0 %v1006
    %1414 = vmatprep.subr.bf16.mxu0 %v1009
    %1415 = vmatpush1.bf16.msra.mxu0 %v1008
    %1416 = vmatprep.subr.bf16.mxu0 %v1011
    %1417 = vmatpush1.bf16.msra.mxu0 %v1010
    %1418 = vmatprep.subr.bf16.mxu0 %v1013
    %1419 = vmatpush1.bf16.msra.mxu0 %v1012
    %1420 = vmatprep.mubr.bf16.mxu0 %v323
    %1421 = vmatmul.mubr.bf16.gmra.mrb[0].mxu0 %v322
    %v1422 = vpop.f32.mrb[0].mxu0
    %v1423 = vadd.f32 %v1380, %v1422
    %v1424 = vpop.f32.mrb[0].mxu0
    %v1425 = vadd.f32 %v1382, %v1424
    %v1426 = vpop.f32.mrb[0].mxu0
    %v1427 = vadd.f32 %v1384, %v1426
    %v1428 = vpop.f32.mrb[0].mxu0
    %v1429 = vadd.f32 %v1386, %v1428
    %1430 = vdwg.mxu0
    %1431 = vmatprep.subr.bf16.mxu0 %v1015
    %1432 = vmatpush1.bf16.msra.mxu0 %v1014
    %1433 = vmatprep.subr.bf16.mxu0 %v1017
    %1434 = vmatpush1.bf16.msra.mxu0 %v1016
    %1435 = vmatprep.subr.bf16.mxu0 %v1019
    %1436 = vmatpush1.bf16.msra.mxu0 %v1018
    %1437 = vmatprep.subr.bf16.mxu0 %v1021
    %1438 = vmatpush1.bf16.msra.mxu0 %v1020
    %1439 = vmatprep.subr.bf16.mxu0 %v1023
    %1440 = vmatpush1.bf16.msra.mxu0 %v1022
    %1441 = vmatprep.subr.bf16.mxu0 %v1025
    %1442 = vmatpush1.bf16.msra.mxu0 %v1024
    %1443 = vmatprep.subr.bf16.mxu0 %v1027
    %1444 = vmatpush1.bf16.msra.mxu0 %v1026
    %1445 = vmatprep.subr.bf16.mxu0 %v1029
    %1446 = vmatpush1.bf16.msra.mxu0 %v1028
    %1447 = vmatprep.subr.bf16.mxu0 %v1031
    %1448 = vmatpush1.bf16.msra.mxu0 %v1030
    %1449 = vmatprep.subr.bf16.mxu0 %v1033
    %1450 = vmatpush1.bf16.msra.mxu0 %v1032
    %1451 = vmatprep.subr.bf16.mxu0 %v1035
    %1452 = vmatpush1.bf16.msra.mxu0 %v1034
    %1453 = vmatprep.subr.bf16.mxu0 %v1037
    %1454 = vmatpush1.bf16.msra.mxu0 %v1036
    %1455 = vmatprep.subr.bf16.mxu0 %v1039
    %1456 = vmatpush1.bf16.msra.mxu0 %v1038
    %1457 = vmatprep.subr.bf16.mxu0 %v1041
    %1458 = vmatpush1.bf16.msra.mxu0 %v1040
    %1459 = vmatprep.subr.bf16.mxu0 %v1043
    %1460 = vmatpush1.bf16.msra.mxu0 %v1042
    %1461 = vmatprep.subr.bf16.mxu0 %v1045
    %1462 = vmatpush1.bf16.msra.mxu0 %v1044
    %1463 = vmatprep.mubr.bf16.mxu0 %v325
    %1464 = vmatmul.mubr.bf16.gmra.mrb[0].mxu0 %v324
    %v1465 = vpop.f32.mrb[0].mxu0
    %v1466 = vadd.f32 %v1423, %v1465
    %v1467 = vpop.f32.mrb[0].mxu0
    %v1468 = vadd.f32 %v1425, %v1467
    %v1469 = vpop.f32.mrb[0].mxu0
    %v1470 = vadd.f32 %v1427, %v1469
    %v1471 = vpop.f32.mrb[0].mxu0
    %v1472 = vadd.f32 %v1429, %v1471
    %1473 = vdwg.mxu0
    %1474 = vmatprep.subr.bf16.mxu0 %v1047
    %1475 = vmatpush1.bf16.msra.mxu0 %v1046
    %1476 = vmatprep.subr.bf16.mxu0 %v1049
    %1477 = vmatpush1.bf16.msra.mxu0 %v1048
    %1478 = vmatprep.subr.bf16.mxu0 %v1051
    %1479 = vmatpush1.bf16.msra.mxu0 %v1050
    %1480 = vmatprep.subr.bf16.mxu0 %v1053
    %1481 = vmatpush1.bf16.msra.mxu0 %v1052
    %1482 = vmatprep.subr.bf16.mxu0 %v1055
    %1483 = vmatpush1.bf16.msra.mxu0 %v1054
    %1484 = vmatprep.subr.bf16.mxu0 %v1057
    %1485 = vmatpush1.bf16.msra.mxu0 %v1056
    %1486 = vmatprep.subr.bf16.mxu0 %v1059
    %1487 = vmatpush1.bf16.msra.mxu0 %v1058
    %1488 = vmatprep.subr.bf16.mxu0 %v1061
    %1489 = vmatpush1.bf16.msra.mxu0 %v1060
    %1490 = vmatprep.subr.bf16.mxu0 %v1063
    %1491 = vmatpush1.bf16.msra.mxu0 %v1062
    %1492 = vmatprep.subr.bf16.mxu0 %v1065
    %1493 = vmatpush1.bf16.msra.mxu0 %v1064
    %1494 = vmatprep.subr.bf16.mxu0 %v1067
    %1495 = vmatpush1.bf16.msra.mxu0 %v1066
    %1496 = vmatprep.subr.bf16.mxu0 %v1069
    %1497 = vmatpush1.bf16.msra.mxu0 %v1068
    %1498 = vmatprep.subr.bf16.mxu0 %v1071
    %1499 = vmatpush1.bf16.msra.mxu0 %v1070
    %1500 = vmatprep.subr.bf16.mxu0 %v1073
    %1501 = vmatpush1.bf16.msra.mxu0 %v1072
    %1502 = vmatprep.subr.bf16.mxu0 %v1075
    %1503 = vmatpush1.bf16.msra.mxu0 %v1074
    %1504 = vmatprep.subr.bf16.mxu0 %v1077
    %1505 = vmatpush1.bf16.msra.mxu0 %v1076
    %1506 = vmatprep.mubr.bf16.mxu0 %v327
    %1507 = vmatmul.mubr.bf16.gmra.mrb[0].mxu0 %v326
    %v1508 = vpop.f32.mrb[0].mxu0
    %v1509 = vadd.f32 %v1466, %v1508
    %v1510 = vpop.f32.mrb[0].mxu0
    %v1511 = vadd.f32 %v1468, %v1510
    %v1512 = vpop.f32.mrb[0].mxu0
    %v1513 = vadd.f32 %v1470, %v1512
    %v1514 = vpop.f32.mrb[0].mxu0
    %v1515 = vadd.f32 %v1472, %v1514
    %1516 = vdwg.mxu0
    %1517 = vmatprep.subr.bf16.mxu0 %v1079
    %1518 = vmatpush1.bf16.msra.mxu0 %v1078
    %1519 = vmatprep.subr.bf16.mxu0 %v1081
    %1520 = vmatpush1.bf16.msra.mxu0 %v1080
    %1521 = vmatprep.subr.bf16.mxu0 %v1083
    %1522 = vmatpush1.bf16.msra.mxu0 %v1082
    %1523 = vmatprep.subr.bf16.mxu0 %v1085
    %1524 = vmatpush1.bf16.msra.mxu0 %v1084
    %1525 = vmatprep.subr.bf16.mxu0 %v1087
    %1526 = vmatpush1.bf16.msra.mxu0 %v1086
    %1527 = vmatprep.subr.bf16.mxu0 %v1089
    %1528 = vmatpush1.bf16.msra.mxu0 %v1088
    %1529 = vmatprep.subr.bf16.mxu0 %v1091
    %1530 = vmatpush1.bf16.msra.mxu0 %v1090
    %1531 = vmatprep.subr.bf16.mxu0 %v1093
    %1532 = vmatpush1.bf16.msra.mxu0 %v1092
    %1533 = vmatprep.subr.bf16.mxu0 %v1095
    %1534 = vmatpush1.bf16.msra.mxu0 %v1094
    %1535 = vmatprep.subr.bf16.mxu0 %v1097
    %1536 = vmatpush1.bf16.msra.mxu0 %v1096
    %1537 = vmatprep.subr.bf16.mxu0 %v1099
    %1538 = vmatpush1.bf16.msra.mxu0 %v1098
    %1539 = vmatprep.subr.bf16.mxu0 %v1101
    %1540 = vmatpush1.bf16.msra.mxu0 %v1100
    %1541 = vmatprep.subr.bf16.mxu0 %v1103
    %1542 = vmatpush1.bf16.msra.mxu0 %v1102
    %1543 = vmatprep.subr.bf16.mxu0 %v1105
    %1544 = vmatpush1.bf16.msra.mxu0 %v1104
    %1545 = vmatprep.subr.bf16.mxu0 %v1107
    %1546 = vmatpush1.bf16.msra.mxu0 %v1106
    %1547 = vmatprep.subr.bf16.mxu0 %v1109
    %1548 = vmatpush1.bf16.msra.mxu0 %v1108
    %1549 = vmatprep.mubr.bf16.mxu0 %v329
    %1550 = vmatmul.mubr.bf16.gmra.mrb[0].mxu0 %v328
    %v1551 = vpop.f32.mrb[0].mxu0
    %v1552 = vadd.f32 %v1509, %v1551
    %v1553 = vpop.f32.mrb[0].mxu0
    %v1554 = vadd.f32 %v1511, %v1553
    %v1555 = vpop.f32.mrb[0].mxu0
    %v1556 = vadd.f32 %v1513, %v1555
    %v1557 = vpop.f32.mrb[0].mxu0
    %v1558 = vadd.f32 %v1515, %v1557
    %1559 = vdwg.mxu0
    %v1560 = vmul.f32 %v62, %v62
    %v1561 = vmul.f32 %v63, %v63
    %v1562 = vmul.f32 %v64, %v64
    %v1563 = vmul.f32 %v65, %v65
    %v1564 = vadd.f32 %v1560, %v1561
    %1565 = vadd.xlane.f32.xlu0 %v1564
    %v1566 = vpop.xlane.xlu0 %1565
    %v1567 = vadd.f32 %v1562, %v1563
    %1568 = vadd.xlane.f32.xlu0 %v1567
    %v1569 = vpop.xlane.xlu0 %1568
    %v1570 = vmax.f32 %v1566, 1e-24
    %v1571 = vmax.f32 %v1569, 1e-24
    %v1572 = vrsqrt.pop %v1570
    %v1573 = vrsqrt.pop %v1571
    %v1574 = vmul.f32 %v62, %v1572
    %v1575 = vmul.f32 %v63, %v1572
    %v1576 = vmul.f32 %v64, %v1573
    %v1577 = vmul.f32 %v65, %v1573
    %v1578 = vmul.f32 %v1552, %v1552
    %v1579 = vmul.f32 %v1554, %v1554
    %v1580 = vmul.f32 %v1556, %v1556
    %v1581 = vmul.f32 %v1558, %v1558
    %v1582 = vadd.f32 %v1578, %v1579
    %1583 = vadd.xlane.f32.xlu0 %v1582
    %v1584 = vpop.xlane.xlu0 %1583
    %v1585 = vadd.f32 %v1580, %v1581
    %1586 = vadd.xlane.f32.xlu0 %v1585
    %v1587 = vpop.xlane.xlu0 %1586
    %v1588 = vmax.f32 %v1584, 1e-24
    %v1589 = vmax.f32 %v1587, 1e-24
    %v1590 = vrsqrt.pop %v1588
    %v1591 = vrsqrt.pop %v1589
    %v1592 = vmul.f32 %v1552, %v1590
    %v1593 = vmul.f32 %v1554, %v1590
    %v1594 = vmul.f32 %v1556, %v1591
    %v1595 = vmul.f32 %v1558, %v1591
    %v1596 = vpack.c.bf16 %v1594, %v1592
    %v1597 = vpack.c.bf16 %v1595, %v1593
    %v1598 = vld [vmem:[#allocation5] sm:$0xff]
    %v1599 = vld [vmem:[#allocation5 + $0x8] sm:$0xff]
    %v1600 = vld [vmem:[#allocation5 + $0x10] sm:$0xff]
    %v1601 = vld [vmem:[#allocation5 + $0x18] sm:$0xff]
    %v1602 = vld [vmem:[#allocation5 + $0x20] sm:$0xff]
    %v1603 = vld [vmem:[#allocation5 + $0x28] sm:$0xff]
    %v1604 = vld [vmem:[#allocation5 + $0x30] sm:$0xff]
    %v1605 = vld [vmem:[#allocation5 + $0x38] sm:$0xff]
    %v1606 = vld [vmem:[#allocation5 + $0x40] sm:$0xff]
    %v1607 = vld [vmem:[#allocation5 + $0x48] sm:$0xff]
    %v1608 = vld [vmem:[#allocation5 + $0x50] sm:$0xff]
    %v1609 = vld [vmem:[#allocation5 + $0x58] sm:$0xff]
    %v1610 = vld [vmem:[#allocation5 + $0x60] sm:$0xff]
    %v1611 = vld [vmem:[#allocation5 + $0x68] sm:$0xff]
    %v1612 = vld [vmem:[#allocation5 + $0x70] sm:$0xff]
    %v1613 = vld [vmem:[#allocation5 + $0x78] sm:$0xff]
    %v1614 = vld [vmem:[#allocation5 + $0x80] sm:$0xff]
    %v1615 = vld [vmem:[#allocation5 + $0x88] sm:$0xff]
    %v1616 = vld [vmem:[#allocation5 + $0x90] sm:$0xff]
    %v1617 = vld [vmem:[#allocation5 + $0x98] sm:$0xff]
    %v1618 = vld [vmem:[#allocation5 + $0xa0] sm:$0xff]
    %v1619 = vld [vmem:[#allocation5 + $0xa8] sm:$0xff]
    %v1620 = vld [vmem:[#allocation5 + $0xb0] sm:$0xff]
    %v1621 = vld [vmem:[#allocation5 + $0xb8] sm:$0xff]
    %v1622 = vld [vmem:[#allocation5 + $0xc0] sm:$0xff]
    %v1623 = vld [vmem:[#allocation5 + $0xc8] sm:$0xff]
    %v1624 = vld [vmem:[#allocation5 + $0xd0] sm:$0xff]
    %v1625 = vld [vmem:[#allocation5 + $0xd8] sm:$0xff]
    %v1626 = vld [vmem:[#allocation5 + $0xe0] sm:$0xff]
    %v1627 = vld [vmem:[#allocation5 + $0xe8] sm:$0xff]
    %v1628 = vld [vmem:[#allocation5 + $0xf0] sm:$0xff]
    %v1629 = vld [vmem:[#allocation5 + $0xf8] sm:$0xff]
    %v1630 = vld [vmem:[%s5] sm:$0x3]
    %v1632 = vlaneseq
    %v1633 = vshrl.u32 %v1632, 7
    %v1634 = vsub.s32 0, %v1633
    %v1635 = vrot.slane %v1630, %v1634
    %v1636 = vlaneseq
    %v1637 = vshrl.u32 %v1636, 7
    %v1638 = vsub.s32 1, %v1637
    %v1639 = vrot.slane %v1630, %v1638
    %v1674 = vunpack.c.l.b16 %v1598
    %v1675 = vunpack.c.h.b16 %v1598
    %v1676 = vunpack.c.l.b16 %v1599
    %v1677 = vunpack.c.h.b16 %v1599
    %v1678 = vunpack.c.l.b16 %v1600
    %v1679 = vunpack.c.h.b16 %v1600
    %v1680 = vunpack.c.l.b16 %v1601
    %v1681 = vunpack.c.h.b16 %v1601
    %v1682 = vunpack.c.l.b16 %v1602
    %v1683 = vunpack.c.h.b16 %v1602
    %v1684 = vunpack.c.l.b16 %v1603
    %v1685 = vunpack.c.h.b16 %v1603
    %v1686 = vunpack.c.l.b16 %v1604
    %v1687 = vunpack.c.h.b16 %v1604
    %v1688 = vunpack.c.l.b16 %v1605
    %v1689 = vunpack.c.h.b16 %v1605
    %v1690 = vunpack.c.l.b16 %v1606
    %v1691 = vunpack.c.h.b16 %v1606
    %v1692 = vunpack.c.l.b16 %v1607
    %v1693 = vunpack.c.h.b16 %v1607
    %v1694 = vunpack.c.l.b16 %v1608
    %v1695 = vunpack.c.h.b16 %v1608
    %v1696 = vunpack.c.l.b16 %v1609
    %v1697 = vunpack.c.h.b16 %v1609
    %v1698 = vunpack.c.l.b16 %v1610
    %v1699 = vunpack.c.h.b16 %v1610
    %v1700 = vunpack.c.l.b16 %v1611
    %v1701 = vunpack.c.h.b16 %v1611
    %v1702 = vunpack.c.l.b16 %v1612
    %v1703 = vunpack.c.h.b16 %v1612
    %v1704 = vunpack.c.l.b16 %v1613
    %v1705 = vunpack.c.h.b16 %v1613
    %v1706 = vunpack.c.l.b16 %v1614
    %v1707 = vunpack.c.h.b16 %v1614
    %v1708 = vunpack.c.l.b16 %v1615
    %v1709 = vunpack.c.h.b16 %v1615
    %v1710 = vunpack.c.l.b16 %v1616
    %v1711 = vunpack.c.h.b16 %v1616
    %v1712 = vunpack.c.l.b16 %v1617
    %v1713 = vunpack.c.h.b16 %v1617
    %v1714 = vunpack.c.l.b16 %v1618
    %v1715 = vunpack.c.h.b16 %v1618
    %v1716 = vunpack.c.l.b16 %v1619
    %v1717 = vunpack.c.h.b16 %v1619
    %v1718 = vunpack.c.l.b16 %v1620
    %v1719 = vunpack.c.h.b16 %v1620
    %v1720 = vunpack.c.l.b16 %v1621
    %v1721 = vunpack.c.h.b16 %v1621
    %v1722 = vunpack.c.l.b16 %v1622
    %v1723 = vunpack.c.h.b16 %v1622
    %v1724 = vunpack.c.l.b16 %v1623
    %v1725 = vunpack.c.h.b16 %v1623
    %v1726 = vunpack.c.l.b16 %v1624
    %v1727 = vunpack.c.h.b16 %v1624
    %v1728 = vunpack.c.l.b16 %v1625
    %v1729 = vunpack.c.h.b16 %v1625
    %v1730 = vunpack.c.l.b16 %v1626
    %v1731 = vunpack.c.h.b16 %v1626
    %v1732 = vunpack.c.l.b16 %v1627
    %v1733 = vunpack.c.h.b16 %v1627
    %v1734 = vunpack.c.l.b16 %v1628
    %v1735 = vunpack.c.h.b16 %v1628
    %v1736 = vunpack.c.l.b16 %v1629
    %v1737 = vunpack.c.h.b16 %v1629
    %v1738 = vpack.c.b16 %v1676, %v1674
    %v1739 = vpack.c.b16 %v1677, %v1675
    %v1740 = vpack.c.b16 %v1680, %v1678
    %v1741 = vpack.c.b16 %v1681, %v1679
    %v1742 = vpack.c.b16 %v1684, %v1682
    %v1743 = vpack.c.b16 %v1685, %v1683
    %v1744 = vpack.c.b16 %v1688, %v1686
    %v1745 = vpack.c.b16 %v1689, %v1687
    %v1746 = vpack.c.b16 %v1692, %v1690
    %v1747 = vpack.c.b16 %v1693, %v1691
    %v1748 = vpack.c.b16 %v1696, %v1694
    %v1749 = vpack.c.b16 %v1697, %v1695
    %v1750 = vpack.c.b16 %v1700, %v1698
    %v1751 = vpack.c.b16 %v1701, %v1699
    %v1752 = vpack.c.b16 %v1704, %v1702
    %v1753 = vpack.c.b16 %v1705, %v1703
    %v1754 = vpack.c.b16 %v1708, %v1706
    %v1755 = vpack.c.b16 %v1709, %v1707
    %v1756 = vpack.c.b16 %v1712, %v1710
    %v1757 = vpack.c.b16 %v1713, %v1711
    %v1758 = vpack.c.b16 %v1716, %v1714
    %v1759 = vpack.c.b16 %v1717, %v1715
    %v1760 = vpack.c.b16 %v1720, %v1718
    %v1761 = vpack.c.b16 %v1721, %v1719
    %v1762 = vpack.c.b16 %v1724, %v1722
    %v1763 = vpack.c.b16 %v1725, %v1723
    %v1764 = vpack.c.b16 %v1728, %v1726
    %v1765 = vpack.c.b16 %v1729, %v1727
    %v1766 = vpack.c.b16 %v1732, %v1730
    %v1767 = vpack.c.b16 %v1733, %v1731
    %v1768 = vpack.c.b16 %v1736, %v1734
    %v1769 = vpack.c.b16 %v1737, %v1735
    %1802 = vmatprep.subr.bf16.mxu0 %v1739
    %1803 = vmatpush1.bf16.msra.mxu0 %v1738
    %1804 = vmatprep.subr.bf16.mxu0 %v1741
    %1805 = vmatpush1.bf16.msra.mxu0 %v1740
    %1806 = vmatprep.subr.bf16.mxu0 %v1743
    %1807 = vmatpush1.bf16.msra.mxu0 %v1742
    %1808 = vmatprep.subr.bf16.mxu0 %v1745
    %1809 = vmatpush1.bf16.msra.mxu0 %v1744
    %1810 = vmatprep.subr.bf16.mxu0 %v1747
    %1811 = vmatpush1.bf16.msra.mxu0 %v1746
    %1812 = vmatprep.subr.bf16.mxu0 %v1749
    %1813 = vmatpush1.bf16.msra.mxu0 %v1748
    %1814 = vmatprep.subr.bf16.mxu0 %v1751
    %1815 = vmatpush1.bf16.msra.mxu0 %v1750
    %1816 = vmatprep.subr.bf16.mxu0 %v1753
    %1817 = vmatpush1.bf16.msra.mxu0 %v1752
    %1818 = vmatprep.subr.bf16.mxu0 %v1755
    %1819 = vmatpush1.bf16.msra.mxu0 %v1754
    %1820 = vmatprep.subr.bf16.mxu0 %v1757
    %1821 = vmatpush1.bf16.msra.mxu0 %v1756
    %1822 = vmatprep.subr.bf16.mxu0 %v1759
    %1823 = vmatpush1.bf16.msra.mxu0 %v1758
    %1824 = vmatprep.subr.bf16.mxu0 %v1761
    %1825 = vmatpush1.bf16.msra.mxu0 %v1760
    %1826 = vmatprep.subr.bf16.mxu0 %v1763
    %1827 = vmatpush1.bf16.msra.mxu0 %v1762
    %1828 = vmatprep.subr.bf16.mxu0 %v1765
    %1829 = vmatpush1.bf16.msra.mxu0 %v1764
    %1830 = vmatprep.subr.bf16.mxu0 %v1767
    %1831 = vmatpush1.bf16.msra.mxu0 %v1766
    %1832 = vmatprep.subr.bf16.mxu0 %v1769
    %1833 = vmatpush1.bf16.msra.mxu0 %v1768
    %1834 = vmatprep.mubr.bf16.mxu0 %v1597
    %1835 = vmatmul.mubr.bf16.gmra.mrb[0].mxu0 %v1596
    %v1836 = vpop.f32.mrb[0].mxu0
    %v1837 = vadd.f32 %v1635, %v1836
    %v1838 = vpop.f32.mrb[0].mxu0
    %v1839 = vadd.f32 %v1639, %v1838
    %v1840 = vpop.f32.mrb[0].mxu0
    %v1841 = vadd.f32 %v1635, %v1840
    %v1842 = vpop.f32.mrb[0].mxu0
    %v1843 = vadd.f32 %v1639, %v1842
    %1844 = vdwg.mxu0
    %v1845 = vmul.f32 %v1837, 0.5
    %v1846 = vmul.f32 %v1839, 0.5
    %v1847 = vmul.f32 %v1841, 0.5
    %v1848 = vmul.f32 %v1843, 0.5
    %v1849 = vadd.f32 %v1574, %v1845
    %v1850 = vadd.f32 %v1575, %v1846
    %v1851 = vadd.f32 %v1576, %v1847
    %v1852 = vadd.f32 %v1577, %v1848
    %v1853 = vadd.f32 %v1849, %v1850
    %1854 = vadd.xlane.f32.xlu0 %v1853
    %v1855 = vpop.xlane.xlu0 %1854
    %v1856 = vadd.f32 %v1851, %v1852
    %1857 = vadd.xlane.f32.xlu0 %v1856
    %v1858 = vpop.xlane.xlu0 %1857
    %v1859 = vrcp.pop 256.0
    %v1860 = vmul.f32 %v1855, %v1859
    %v1861 = vmul.f32 %v1858, %v1859
    %v1862 = vsub.f32 %v1849, %v1860
    %v1863 = vsub.f32 %v1850, %v1860
    %v1864 = vsub.f32 %v1851, %v1861
    %v1865 = vsub.f32 %v1852, %v1861
    %v1866 = vmul.f32 %v1862, %v1862
    %v1867 = vmul.f32 %v1863, %v1863
    %v1868 = vmul.f32 %v1864, %v1864
    %v1869 = vmul.f32 %v1865, %v1865
    %v1870 = vadd.f32 %v1866, %v1867
    %1871 = vadd.xlane.f32.xlu0 %v1870
    %v1872 = vpop.xlane.xlu0 %1871
    %v1873 = vadd.f32 %v1868, %v1869
    %1874 = vadd.xlane.f32.xlu0 %v1873
    %v1875 = vpop.xlane.xlu0 %1874
    %v1876 = vmul.f32 %v1872, %v1859
    %v1877 = vmul.f32 %v1875, %v1859
    %v1878 = vadd.f32 %v1876, 1e-05
    %v1879 = vadd.f32 %v1877, 1e-05
    %v1880 = vrsqrt.pop %v1878
    %v1881 = vrsqrt.pop %v1879
    %v1882 = vmul.f32 %v1862, %v1880
    %v1883 = vmul.f32 %v1863, %v1880
    %v1884 = vmul.f32 %v1864, %v1881
    %v1885 = vmul.f32 %v1865, %v1881
    %v1886 = vld [vmem:[%s6] sm:$0x3]
    %v1888 = vlaneseq
    %v1889 = vshrl.u32 %v1888, 7
    %v1890 = vsub.s32 0, %v1889
    %v1891 = vrot.slane %v1886, %v1890
    %v1892 = vlaneseq
    %v1893 = vshrl.u32 %v1892, 7
    %v1894 = vsub.s32 1, %v1893
    %v1895 = vrot.slane %v1886, %v1894
    %v1898 = vmul.f32 %v1882, %v1891
    %v1899 = vmul.f32 %v1883, %v1895
    %v1900 = vmul.f32 %v1884, %v1891
    %v1901 = vmul.f32 %v1885, %v1895
    %v1902 = vadd.f32 %v1898, %v1899
    %1903 = vadd.xlane.f32.xlu0 %v1902
    %v1904 = vpop.xlane.xlu0 %1903
    %v1905 = vadd.f32 %v1900, %v1901
    %1906 = vadd.xlane.f32.xlu0 %v1905
    %v1907 = vpop.xlane.xlu0 %1906
    %v1908 = vld [vmem:[%s7] sm:$0x3]
    %v1910 = vlaneseq
    %v1911 = vshrl.u32 %v1910, 7
    %v1912 = vsub.s32 0, %v1911
    %v1913 = vrot.slane %v1908, %v1912
    %v1914 = vlaneseq
    %v1915 = vshrl.u32 %v1914, 7
    %v1916 = vsub.s32 1, %v1915
    %v1917 = vrot.slane %v1908, %v1916
    %v1920 = vmul.f32 %v1592, %v1913
    %v1921 = vmul.f32 %v1593, %v1917
    %v1922 = vmul.f32 %v1594, %v1913
    %v1923 = vmul.f32 %v1595, %v1917
    %v1924 = vadd.f32 %v1920, %v1921
    %1925 = vadd.xlane.f32.xlu0 %v1924
    %v1926 = vpop.xlane.xlu0 %1925
    %v1927 = vadd.f32 %v1922, %v1923
    %1928 = vadd.xlane.f32.xlu0 %v1927
    %v1929 = vpop.xlane.xlu0 %1928
    %v1930 = vadd.f32 %v1904, %v1926
    %v1931 = vadd.f32 %v1907, %v1929
    %v1932 = vld [vmem:[#allocation2] sm:$0x1]
    %v1934 = vlaneseq
    %v1935 = vshrl.u32 %v1934, 7
    %v1936 = vsub.s32 0, %v1935
    %v1937 = vrot.slane %v1932, %v1936
    %v1939 = vadd.f32 %v1930, %v1937
    %v1940 = vadd.f32 %v1931, %v1937
    %vm1941 = vcmask 7168
    %1942 = vst.msk [vmem:[%s9] sm:$0xff] %vm1941, %v1939
    %1943 = vst.msk [vmem:[%s9 + $0x8] sm:$0xff] %vm1941, %v1940
    // Predicated region
    $region46: #{_pallas_head.1} parent=1 // pred_check
      _
    $region47: #{_pallas_head.1} parent=1 // pred_check_branch
      %1945 = sbr.rel (0) target = $region49
    $region48: #{_pallas_head.1} parent=1 // pred_region
      _
    $region49: #{_pallas_head.1} parent=1 // pred_fallthru
      _
    // Predicated region
    $region50: #{_pallas_head.1} parent=1 // pred_check
      _
    $region51: #{_pallas_head.1} parent=1 // pred_check_branch
      %1947 = sbr.rel (0) target = $region53
    $region52: #{_pallas_head.1} parent=1 // pred_region
      _
    $region53: #{_pallas_head.1} parent=1 // pred_fallthru
      _
    %1948 = vsyncpa [#allocation4], 1
    %1949 = vsyncpa [#allocation6], 1

</llo_original>
